<compile_context>
chip_gen: v7x
topology: tpu7x:2x2x1
jax: 0.10.0
libtpu: 0.0.40
codegen_flags: <defaults>
</compile_context>

<pallas_src>
import jax
import jax.numpy as jnp
from jax.experimental import pallas as pl
from jax.experimental.pallas import tpu as pltpu

BN_EPS = 1e-5


def _round_up(n, m):
    return ((n + m - 1) // m) * m


# ----------------------------------------------------------------------------
# Kernel (feature-major: activations are (feat, TB), weights are (out, in))
# ----------------------------------------------------------------------------
def fcnn_kernel(xy_ref,
                w1_ref, b1_ref,
                w2_ref, b2_ref,
                w3_ref, b3_ref,
                w4_ref, b4_ref,
                w5_ref, b5_ref,
                out_ref):
    f32, bf16 = jnp.float32, jnp.bfloat16

    def dense_relu(w_ref, b_ref, h):
        # MXU: bf16 x bf16 -> f32 accumulation; bias in f32; ReLU on the
        # bf16-cast result (cast/ReLU commute, halves VALU work on bf16 VPUs).
        a = jnp.dot(w_ref[...], h, preferred_element_type=f32) + b_ref[...]
        return jnp.maximum(a.astype(bf16), 0.0)

    h = xy_ref[...].astype(bf16)               # (8,   TB) -- rows 6..7 are zero pad
    h = dense_relu(w1_ref, b1_ref, h)          # (64,  TB)  fc1 + ReLU (BN1 folded ahead)
    h = dense_relu(w2_ref, b2_ref, h)          # (128, TB)  fc2 (BN1 folded) + ReLU
    h = dense_relu(w3_ref, b3_ref, h)          # (256, TB)  fc3 (BN2 folded) + ReLU
    h = dense_relu(w4_ref, b4_ref, h)          # (256, TB)  fc4 + ReLU

    # fc5 (BN3 folded). w5 is sublane-padded to (8, 256); only row 0 is real.
    logits = jnp.dot(w5_ref[...], h, preferred_element_type=f32)   # (8, TB)
    out_ref[...] = jax.nn.sigmoid(logits[0:1, :] + b5_ref[...])    # (1, TB) lane-dense


# ----------------------------------------------------------------------------
# Parameter construction (PyTorch-style), BN folding (one-time prep), reference
# ----------------------------------------------------------------------------
def make_params(key):
    """PyTorch-style Linear init; non-trivial eval-mode BN params/running stats."""
    def lin(k, fi, fo):
        kw, kb = jax.random.split(k)
        bound = 1.0 / (fi ** 0.5)
        w = jax.random.uniform(kw, (fi, fo), jnp.float32, -bound, bound)
        b = jax.random.uniform(kb, (fo,), jnp.float32, -bound, bound)
        return w, b

    def bn(k, d):
        kg, kb, km, kv = jax.random.split(k, 4)
        return dict(
            gamma=jax.random.uniform(kg, (d,), jnp.float32, 0.5, 1.5),
            beta=jax.random.uniform(kb, (d,), jnp.float32, -0.3, 0.3),
            mean=jax.random.uniform(km, (d,), jnp.float32, -0.2, 0.2),
            var=jax.random.uniform(kv, (d,), jnp.float32, 0.5, 1.5),
        )

    k = jax.random.split(key, 8)
    p = {}
    p["w1"], p["b1"] = lin(k[0], 6, 64)
    p["bn1"] = bn(k[1], 64)
    p["w2"], p["b2"] = lin(k[2], 64, 128)
    p["bn2"] = bn(k[3], 128)
    p["w3"], p["b3"] = lin(k[4], 128, 256)
    p["w4"], p["b4"] = lin(k[5], 256, 256)
    p["bn3"] = bn(k[6], 256)
    p["w5"], p["b5"] = lin(k[7], 256, 1)
    return p


def fold_params(p):
    """One-time prep (keep OFF the per-inference path):
    fold eval-mode BN (after ReLU) into the next Linear, transpose weights to
    feature-major (out, in), cast MXU operands to bf16, reshape biases to
    (out, 1) columns. Returns the flat kernel-operand list."""
    f32, bf16 = jnp.float32, jnp.bfloat16

    def bn_scale_shift(bnp):
        s = bnp["gamma"] / jnp.sqrt(bnp["var"] + BN_EPS)
        t = bnp["beta"] - bnp["mean"] * s
        return s, t

    s1, t1 = bn_scale_shift(p["bn1"])
    s2, t2 = bn_scale_shift(p["bn2"])
    s3, t3 = bn_scale_shift(p["bn3"])

    # fc1: (6,64) -> feature-major (64,8); columns 6..7 are zero input padding.
    w1 = jnp.zeros((64, 8), f32).at[:, :6].set(p["w1"].T)
    b1 = p["b1"].reshape(-1, 1)

    # Dropout is identity in eval; BN1 -> fc2, BN2 -> fc3, BN3 -> fc5.
    w2 = (s1[:, None] * p["w2"]).T                      # (128, 64)
    b2 = (p["b2"] + t1 @ p["w2"]).reshape(-1, 1)
    w3 = (s2[:, None] * p["w3"]).T                      # (256, 128)
    b3 = (p["b3"] + t2 @ p["w3"]).reshape(-1, 1)
    w4 = p["w4"].T                                      # (256, 256)
    b4 = p["b4"].reshape(-1, 1)

    w5f = s3[:, None] * p["w5"]                         # (256, 1) folded
    b5 = (p["b5"] + t3 @ p["w5"]).reshape(1, 1)
    w5 = jnp.zeros((8, 256), f32).at[0].set(w5f[:, 0])  # sublane-padded, row 0 real

    kparams = []
    for w, b in ((w1, b1), (w2, b2), (w3, b3), (w4, b4), (w5, b5)):
        kparams.append(w.astype(bf16))
        kparams.append(b.astype(f32))
    return kparams


def ref_forward(x, y, p):
    """Pure-JAX f32 reference matching the PyTorch eval-mode forward."""
    def bn_apply(h, bnp):
        s = bnp["gamma"] / jnp.sqrt(bnp["var"] + BN_EPS)
        return (h - bnp["mean"]) * s + bnp["beta"]

    h = jnp.concatenate([x, y], axis=1)
    h = bn_apply(jnp.maximum(h @ p["w1"] + p["b1"], 0.0), p["bn1"])
    h = bn_apply(jnp.maximum(h @ p["w2"] + p["b2"], 0.0), p["bn2"])
    h = jnp.maximum(h @ p["w3"] + p["b3"], 0.0)
    h = bn_apply(jnp.maximum(h @ p["w4"] + p["b4"], 0.0), p["bn3"])
    return jax.nn.sigmoid(h @ p["w5"] + p["b5"])


# ----------------------------------------------------------------------------
# Wrapper
# ----------------------------------------------------------------------------
def fcnn_forward(x, y, kparams, *, tb=2048):
    """Eval-mode FCNN forward. x:(B,2), y:(B,4), kparams=fold_params(...) -> (B,1)."""
    B = x.shape[0]
    # Lane-aligned batch tile. Large default (amortizes ~0.35us/step on
    # v5e/v6e) but capped so the grid has >=2 steps where possible, so the
    # "parallel" batch axis can use both v7x TensorCores.
    tb_cap = max(128, _round_up(pl.cdiv(B, 2), 128))
    tb = int(_round_up(min(int(tb), tb_cap), 128))
    pb = _round_up(B, tb)
    grid = pb // tb

    # Merged, feature-major input: (8, pb) f32, rows 0..1 = x^T, 2..5 = y^T,
    # rows 6..7 zero (match fc1's zero-padded columns). Lane-dense (8, tb) DMA.
    xy_t = jnp.concatenate(
        [x.T.astype(jnp.float32), y.T.astype(jnp.float32),
         jnp.zeros((2, B), jnp.float32)], axis=0)
    if pb != B:
        xy_t = jnp.pad(xy_t, ((0, 0), (0, pb - B)))

    def resident_spec(shape):
        # Constant block index => param stays resident in VMEM (no re-DMA).
        return pl.BlockSpec(shape, lambda i: (0,) * len(shape))

    in_specs = ([pl.BlockSpec((8, tb), lambda i: (0, i))]
                + [resident_spec(p.shape) for p in kparams])
    out_specs = pl.BlockSpec((1, tb), lambda i: (0, i))

    flops_per_row = 2 * (8 * 64 + 64 * 128 + 128 * 256 + 256 * 256 + 256 * 8)
    param_bytes = sum(int(p.size) * p.dtype.itemsize for p in kparams)
    cost = pl.CostEstimate(
        flops=flops_per_row * pb,
        transcendentals=pb,
        bytes_accessed=pb * (8 * 4 + 4) + param_bytes)

    out = pl.pallas_call(
        fcnn_kernel,
        out_shape=jax.ShapeDtypeStruct((1, pb), jnp.float32),
        grid=(grid,),
        in_specs=in_specs,
        out_specs=out_specs,
        compiler_params=pltpu.CompilerParams(
            dimension_semantics=("parallel",),
            vmem_limit_bytes=32 * 1024 * 1024),
        cost_estimate=cost,
    )(xy_t, *kparams)

    # Lane-dense (1, pb) row -> (B, 1)
    return out[0, :B].reshape(B, 1)


if __name__ == "__main__":
    key = jax.random.PRNGKey(0)
    kx, ky, kp = jax.random.split(key, 3)
    B = 200                      # deliberately not a multiple of the 128-lane tile
    x = jax.random.normal(kx, (B, 2), jnp.float32)
    y = jax.random.normal(ky, (B, 4), jnp.float32)
    params = make_params(kp)

    kparams = fold_params(params)          # one-time prep, off the hot path
    fwd = jax.jit(fcnn_forward, static_argnames=("tb",))
    out = fwd(x, y, kparams, tb=2048)      # tb capped -> 2 grid steps here
    out = jax.block_until_ready(out)

    ref = ref_forward(x, y, params)
    assert out.shape == (B, 1), out.shape
    err = float(jnp.max(jnp.abs(out - ref)))
    # bf16 MXU operands (f32 accumulation) => loose tolerance on sigmoid output.
    assert err < 2e-2, err
    print("KERNEL_OK")
</pallas_src>

<mosaic_0001>
module attributes {stable_mosaic.version = 11 : i64} {
  func.func @fcnn_kernel(%arg0: i32, %arg1: memref<8x128xf32, #tpu.memory_space<vmem>>, %arg2: memref<64x8xbf16, #tpu.memory_space<vmem>>, %arg3: memref<64x1xf32, #tpu.memory_space<vmem>>, %arg4: memref<128x64xbf16, #tpu.memory_space<vmem>>, %arg5: memref<128x1xf32, #tpu.memory_space<vmem>>, %arg6: memref<256x128xbf16, #tpu.memory_space<vmem>>, %arg7: memref<256x1xf32, #tpu.memory_space<vmem>>, %arg8: memref<256x256xbf16, #tpu.memory_space<vmem>>, %arg9: memref<256x1xf32, #tpu.memory_space<vmem>>, %arg10: memref<8x256xbf16, #tpu.memory_space<vmem>>, %arg11: memref<1x1xf32, #tpu.memory_space<vmem>>, %arg12: memref<1x128xf32, #tpu.memory_space<vmem>>) attributes {dimension_semantics = [#tpu.dimension_semantics<parallel>], iteration_bounds = array<i64: 2>, scalar_prefetch = 0 : i64, scratch_operands = 0 : i64, tpu.core_type = #tpu.core_type<tc>, window_params = [{transform_indices = @transform_0, window_bounds = array<i64: 8, 128>}, {pipeline_mode = #tpu.pipeline_mode<synchronous>, transform_indices = @transform_1, window_bounds = array<i64: 64, 8>}, {pipeline_mode = #tpu.pipeline_mode<synchronous>, transform_indices = @transform_2, window_bounds = array<i64: 64, 1>}, {pipeline_mode = #tpu.pipeline_mode<synchronous>, transform_indices = @transform_3, window_bounds = array<i64: 128, 64>}, {pipeline_mode = #tpu.pipeline_mode<synchronous>, transform_indices = @transform_4, window_bounds = array<i64: 128, 1>}, {pipeline_mode = #tpu.pipeline_mode<synchronous>, transform_indices = @transform_5, window_bounds = array<i64: 256, 128>}, {pipeline_mode = #tpu.pipeline_mode<synchronous>, transform_indices = @transform_6, window_bounds = array<i64: 256, 1>}, {pipeline_mode = #tpu.pipeline_mode<synchronous>, transform_indices = @transform_7, window_bounds = array<i64: 256, 256>}, {pipeline_mode = #tpu.pipeline_mode<synchronous>, transform_indices = @transform_8, window_bounds = array<i64: 256, 1>}, {pipeline_mode = #tpu.pipeline_mode<synchronous>, transform_indices = @transform_9, window_bounds = array<i64: 8, 256>}, {pipeline_mode = #tpu.pipeline_mode<synchronous>, transform_indices = @transform_10, window_bounds = array<i64: 1, 1>}, {transform_indices = @transform_11, window_bounds = array<i64: 1, 128>}]} {
    %c0 = arith.constant 0 : index
    %c0_0 = arith.constant 0 : index
    %0 = vector.load %arg1[%c0, %c0_0] : memref<8x128xf32, #tpu.memory_space<vmem>>, vector<8x128xf32>
    %1 = arith.truncf %0 : vector<8x128xf32> to vector<8x128xbf16>
    %c0_1 = arith.constant 0 : index
    %c0_2 = arith.constant 0 : index
    %2 = vector.load %arg2[%c0_1, %c0_2] : memref<64x8xbf16, #tpu.memory_space<vmem>>, vector<64x8xbf16>
    %cst = arith.constant dense<0.000000e+00> : vector<64x128xf32>
    %3 = tpu.matmul %2, %1, %cst {dimension_numbers = #tpu.dot_dimension_numbers<[1], [0], [0], [1], [0, 0, 1, 1], [], []>} : vector<64x8xbf16>, vector<8x128xbf16>, vector<64x128xf32> -> vector<64x128xf32>
    %c0_3 = arith.constant 0 : index
    %c0_4 = arith.constant 0 : index
    %4 = vector.load %arg3[%c0_3, %c0_4] : memref<64x1xf32, #tpu.memory_space<vmem>>, vector<64x1xf32>
    %5 = vector.broadcast %4 : vector<64x1xf32> to vector<64x128xf32>
    %6 = arith.addf %3, %5 : vector<64x128xf32>
    %7 = arith.truncf %6 : vector<64x128xf32> to vector<64x128xbf16>
    %cst_5 = arith.constant 0.000000e+00 : bf16
    %8 = vector.broadcast %cst_5 : bf16 to vector<64x128xbf16>
    %9 = arith.maximumf %7, %8 : vector<64x128xbf16>
    %c0_6 = arith.constant 0 : index
    %c0_7 = arith.constant 0 : index
    %10 = vector.load %arg4[%c0_6, %c0_7] : memref<128x64xbf16, #tpu.memory_space<vmem>>, vector<128x64xbf16>
    %cst_8 = arith.constant dense<0.000000e+00> : vector<128x128xf32>
    %11 = tpu.matmul %10, %9, %cst_8 {dimension_numbers = #tpu.dot_dimension_numbers<[1], [0], [0], [1], [0, 0, 1, 1], [], []>} : vector<128x64xbf16>, vector<64x128xbf16>, vector<128x128xf32> -> vector<128x128xf32>
    %c0_9 = arith.constant 0 : index
    %c0_10 = arith.constant 0 : index
    %12 = vector.load %arg5[%c0_9, %c0_10] : memref<128x1xf32, #tpu.memory_space<vmem>>, vector<128x1xf32>
    %13 = vector.broadcast %12 : vector<128x1xf32> to vector<128x128xf32>
    %14 = arith.addf %11, %13 : vector<128x128xf32>
    %15 = arith.truncf %14 : vector<128x128xf32> to vector<128x128xbf16>
    %cst_11 = arith.constant 0.000000e+00 : bf16
    %16 = vector.broadcast %cst_11 : bf16 to vector<128x128xbf16>
    %17 = arith.maximumf %15, %16 : vector<128x128xbf16>
    %c0_12 = arith.constant 0 : index
    %c0_13 = arith.constant 0 : index
    %18 = vector.load %arg6[%c0_12, %c0_13] : memref<256x128xbf16, #tpu.memory_space<vmem>>, vector<256x128xbf16>
    %cst_14 = arith.constant dense<0.000000e+00> : vector<256x128xf32>
    %19 = tpu.matmul %18, %17, %cst_14 {dimension_numbers = #tpu.dot_dimension_numbers<[1], [0], [0], [1], [0, 0, 1, 1], [], []>} : vector<256x128xbf16>, vector<128x128xbf16>, vector<256x128xf32> -> vector<256x128xf32>
    %c0_15 = arith.constant 0 : index
    %c0_16 = arith.constant 0 : index
    %20 = vector.load %arg7[%c0_15, %c0_16] : memref<256x1xf32, #tpu.memory_space<vmem>>, vector<256x1xf32>
    %21 = vector.broadcast %20 : vector<256x1xf32> to vector<256x128xf32>
    %22 = arith.addf %19, %21 : vector<256x128xf32>
    %23 = arith.truncf %22 : vector<256x128xf32> to vector<256x128xbf16>
    %cst_17 = arith.constant 0.000000e+00 : bf16
    %24 = vector.broadcast %cst_17 : bf16 to vector<256x128xbf16>
    %25 = arith.maximumf %23, %24 : vector<256x128xbf16>
    %c0_18 = arith.constant 0 : index
    %c0_19 = arith.constant 0 : index
    %26 = vector.load %arg8[%c0_18, %c0_19] : memref<256x256xbf16, #tpu.memory_space<vmem>>, vector<256x256xbf16>
    %cst_20 = arith.constant dense<0.000000e+00> : vector<256x128xf32>
    %27 = tpu.matmul %26, %25, %cst_20 {dimension_numbers = #tpu.dot_dimension_numbers<[1], [0], [0], [1], [0, 0, 1, 1], [], []>} : vector<256x256xbf16>, vector<256x128xbf16>, vector<256x128xf32> -> vector<256x128xf32>
    %c0_21 = arith.constant 0 : index
    %c0_22 = arith.constant 0 : index
    %28 = vector.load %arg9[%c0_21, %c0_22] : memref<256x1xf32, #tpu.memory_space<vmem>>, vector<256x1xf32>
    %29 = vector.broadcast %28 : vector<256x1xf32> to vector<256x128xf32>
    %30 = arith.addf %27, %29 : vector<256x128xf32>
    %31 = arith.truncf %30 : vector<256x128xf32> to vector<256x128xbf16>
    %cst_23 = arith.constant 0.000000e+00 : bf16
    %32 = vector.broadcast %cst_23 : bf16 to vector<256x128xbf16>
    %33 = arith.maximumf %31, %32 : vector<256x128xbf16>
    %c0_24 = arith.constant 0 : index
    %c0_25 = arith.constant 0 : index
    %34 = vector.load %arg10[%c0_24, %c0_25] : memref<8x256xbf16, #tpu.memory_space<vmem>>, vector<8x256xbf16>
    %cst_26 = arith.constant dense<0.000000e+00> : vector<8x128xf32>
    %35 = tpu.matmul %34, %33, %cst_26 {dimension_numbers = #tpu.dot_dimension_numbers<[1], [0], [0], [1], [0, 0, 1, 1], [], []>} : vector<8x256xbf16>, vector<256x128xbf16>, vector<8x128xf32> -> vector<8x128xf32>
    %36 = vector.extract_strided_slice %35 {offsets = [0, 0], sizes = [1, 128], strides = [1, 1]} : vector<8x128xf32> to vector<1x128xf32>
    %c0_27 = arith.constant 0 : index
    %c0_28 = arith.constant 0 : index
    %37 = vector.load %arg11[%c0_27, %c0_28] : memref<1x1xf32, #tpu.memory_space<vmem>>, vector<1x1xf32>
    %38 = vector.broadcast %37 : vector<1x1xf32> to vector<1x128xf32>
    %39 = arith.addf %36, %38 : vector<1x128xf32>
    %40 = arith.negf %39 : vector<1x128xf32>
    %41 = math.exp %40 : vector<1x128xf32>
    %cst_29 = arith.constant 1.000000e+00 : f32
    %42 = vector.broadcast %cst_29 : f32 to vector<1x128xf32>
    %43 = arith.addf %42, %41 : vector<1x128xf32>
    %44 = arith.divf %42, %43 : vector<1x128xf32>
    %c0_30 = arith.constant 0 : index
    %c0_31 = arith.constant 0 : index
    %45 = vector.load %arg12[%c0_30, %c0_31] : memref<1x128xf32, #tpu.memory_space<vmem>>, vector<1x128xf32>
    tpu.vector_store %arg12[%c0_30, %c0_31], %44 {strides = array<i32>} : memref<1x128xf32, #tpu.memory_space<vmem>>, vector<1x128xf32>,
    return
  }
  func.func @transform_0(%arg0: i32) -> (i32, i32) {
    %c0_i32 = arith.constant 0 : i32
    %c0_i32_0 = arith.constant 0 : i32
    return %c0_i32, %arg0 : i32, i32
  }
  func.func @transform_1(%arg0: i32) -> (i32, i32) {
    %c0_i32 = arith.constant 0 : i32
    %c0_i32_0 = arith.constant 0 : i32
    %c0_i32_1 = arith.constant 0 : i32
    return %c0_i32, %c0_i32_0 : i32, i32
  }
  func.func @transform_2(%arg0: i32) -> (i32, i32) {
    %c0_i32 = arith.constant 0 : i32
    %c0_i32_0 = arith.constant 0 : i32
    %c0_i32_1 = arith.constant 0 : i32
    return %c0_i32, %c0_i32_0 : i32, i32
  }
  func.func @transform_3(%arg0: i32) -> (i32, i32) {
    %c0_i32 = arith.constant 0 : i32
    %c0_i32_0 = arith.constant 0 : i32
    %c0_i32_1 = arith.constant 0 : i32
    return %c0_i32, %c0_i32_0 : i32, i32
  }
  func.func @transform_4(%arg0: i32) -> (i32, i32) {
    %c0_i32 = arith.constant 0 : i32
    %c0_i32_0 = arith.constant 0 : i32
    %c0_i32_1 = arith.constant 0 : i32
    return %c0_i32, %c0_i32_0 : i32, i32
  }
  func.func @transform_5(%arg0: i32) -> (i32, i32) {
    %c0_i32 = arith.constant 0 : i32
    %c0_i32_0 = arith.constant 0 : i32
    %c0_i32_1 = arith.constant 0 : i32
    return %c0_i32, %c0_i32_0 : i32, i32
  }
  func.func @transform_6(%arg0: i32) -> (i32, i32) {
    %c0_i32 = arith.constant 0 : i32
    %c0_i32_0 = arith.constant 0 : i32
    %c0_i32_1 = arith.constant 0 : i32
    return %c0_i32, %c0_i32_0 : i32, i32
  }
  func.func @transform_7(%arg0: i32) -> (i32, i32) {
    %c0_i32 = arith.constant 0 : i32
    %c0_i32_0 = arith.constant 0 : i32
    %c0_i32_1 = arith.constant 0 : i32
    return %c0_i32, %c0_i32_0 : i32, i32
  }
  func.func @transform_8(%arg0: i32) -> (i32, i32) {
    %c0_i32 = arith.constant 0 : i32
    %c0_i32_0 = arith.constant 0 : i32
    %c0_i32_1 = arith.constant 0 : i32
    return %c0_i32, %c0_i32_0 : i32, i32
  }
  func.func @transform_9(%arg0: i32) -> (i32, i32) {
    %c0_i32 = arith.constant 0 : i32
    %c0_i32_0 = arith.constant 0 : i32
    %c0_i32_1 = arith.constant 0 : i32
    return %c0_i32, %c0_i32_0 : i32, i32
  }
  func.func @transform_10(%arg0: i32) -> (i32, i32) {
    %c0_i32 = arith.constant 0 : i32
    %c0_i32_0 = arith.constant 0 : i32
    %c0_i32_1 = arith.constant 0 : i32
    return %c0_i32, %c0_i32_0 : i32, i32
  }
  func.func @transform_11(%arg0: i32) -> (i32, i32) {
    %c0_i32 = arith.constant 0 : i32
    %c0_i32_0 = arith.constant 0 : i32
    return %c0_i32, %arg0 : i32, i32
  }
}

</mosaic_0001>

<llo_original>
// kernel: fcnn_forward.1
$region0: #{fcnn_forward.1}
  #allocation0 [shape = 'u32[]', space=smem, size = 0x4, offset = 0x4, fixed_abs, tag = 'smem constant byte address 0x4 - core index']
  #allocation1 [shape = 'u32[144,128]{1,0:T(1,128)}', space=vmem, size = 0x12000, scoped, tag = 'internal scratch']
  #allocation2 [shape = 'f32[1,1]{1,0:T(1,128)S(1)}', space=vmem, size = 0x200, scoped, tag = 'scoped memory for fcnn_forward.1']
  %s0 = inlined_call_operand.vmem [shape: f32[8,256], index: 0, kind: input, shape index: {}]
  %s1 = inlined_call_operand.vmem [shape: bf16[64,8], index: 1, kind: input, shape index: {}]
  %s2 = inlined_call_operand.vmem [shape: f32[64,1], index: 2, kind: input, shape index: {}]
  %s3 = inlined_call_operand.vmem [shape: bf16[128,64], index: 3, kind: input, shape index: {}]
  %s4 = inlined_call_operand.vmem [shape: f32[128,1], index: 4, kind: input, shape index: {}]
  %s5 = inlined_call_operand.vmem [shape: bf16[256,128], index: 5, kind: input, shape index: {}]
  %s6 = inlined_call_operand.vmem [shape: f32[256,1], index: 6, kind: input, shape index: {}]
  %s7 = inlined_call_operand.vmem [shape: bf16[256,256], index: 7, kind: input, shape index: {}]
  %s8 = inlined_call_operand.vmem [shape: f32[256,1], index: 8, kind: input, shape index: {}]
  %s9 = inlined_call_operand.vmem [shape: bf16[8,256], index: 9, kind: input, shape index: {}]
  %s10 = inlined_call_operand.<no memory space> [shape: f32[1,1], index: 10, kind: input, shape index: {}]
  %s11 = inlined_call_operand.vmem [shape: f32[1,256], index: 11, kind: output, shape index: {}]
  %s12 = sld [smem:[#allocation0]]
  $region77: #{fcnn_forward.1} parent=0
    _
  %s14 = ssub.s32 1, %s12
  %s15 = scalar_select 0, %s14, %s12
  %v16 = vstv %s10
  %17 = vst [vmem:[#allocation2] sm:$0x1] %v16
  loop: start=0, step=1, limit=4
  $region2: #{fcnn_forward.1} parent=0 // loop_pre_header
    _
  $region3: #{fcnn_forward.1} parent=0 // loop_header
    %s19 = sphi 0, %s23
    %p20 = scmp.ge.s32.totalorder %s19, 4
    %s29 = sphi 0, %s31
    %s32 = sphi 0, %s29
    %s33 = sphi 0, %s32
    %s49 = sphi 0, %s33
    %s53 = sphi 0, %s53
    %s55 = sphi 0, %s53
    %s56 = sphi 0, %s55
    %s70 = sphi 0, %s56
    %s74 = sphi 0, %s74
    %s76 = sphi 0, %s74
    %s77 = sphi 0, %s76
    %s91 = sphi 0, %s77
    %s95 = sphi 0, %s95
    %s97 = sphi 0, %s95
    %s98 = sphi 0, %s97
    %s112 = sphi 0, %s98
    %s116 = sphi 0, %s116
    %s118 = sphi 0, %s116
    %s119 = sphi 0, %s118
    %s133 = sphi 0, %s119
    %s137 = sphi 0, %s137
    %s139 = sphi 0, %s137
    %s140 = sphi 0, %s139
    %s154 = sphi 0, %s140
    %s158 = sphi 0, %s158
    %s160 = sphi 0, %s158
    %s161 = sphi 0, %s160
    %s175 = sphi 0, %s161
    %s179 = sphi 0, %s179
    %s181 = sphi 0, %s179
    %s182 = sphi 0, %s181
    %s196 = sphi 0, %s182
    %s200 = sphi 0, %s200
    %s202 = sphi 0, %s200
    %s203 = sphi 0, %s202
    %s217 = sphi 0, %s203
    %s221 = sphi 0, %s221
    %s223 = sphi 0, %s221
    %s224 = sphi 0, %s223
    %s238 = sphi 0, %s224
    %s242 = sphi 0, %s242
    %s244 = sphi 0, %s242
    %s245 = sphi 0, %s244
    %s259 = sphi 0, %s245
    %s265 = sphi 0, %s267
    %s268 = sphi 0, %s265
    %s269 = sphi 0, %s268
    %s285 = sphi 0, %s269
  $region4: #{fcnn_forward.1} parent=0 // loop_header_branch
    %22 = sbr.rel (%p20) target = $region8
  $region5: #{fcnn_forward.1} parent=0 // loop_body
    %s24 = ssub.s32 %s19, 1
    %s25 = ssub.s32 %s19, 2
    %s26 = sadd.s32 %s19, 1
    %s27 = ssub.s32 %s19, %s26
    %p28 = scmp.eq.s32.totalorder %s27, 0
    %s30 = sadd.s32 %s29, 1
    %s31 = scalar_select %p28, %s29, %s30
    %p34 = pneg %p28
    %p35 = scmp.eq.s32.totalorder %s19, 1
    %p36 = por %p34, %p35
    %p37 = scmp.ne.s32.totalorder %s29, %s32
    %p38 = scmp.eq.s32.totalorder %s19, 0
    %p39 = por %p37, %p38
    %p40 = scmp.ne.s32.totalorder %s29, %s32
    %p41 = scmp.eq.s32.totalorder %s24, 1
    %p42 = por %p40, %p41
    %p43 = scmp.ne.s32.totalorder %s32, %s33
    %p44 = scmp.eq.s32.totalorder %s24, 0
    %p45 = por %p43, %p44
    %p46 = scmp.ne.s32.totalorder %s32, %s33
    %p47 = scmp.eq.s32.totalorder %s25, 1
    %p48 = por %p46, %p47
    %p50 = scmp.ne.s32.totalorder %s33, %s49
    %p51 = scmp.eq.s32.totalorder %s25, 0
    %p52 = por %p50, %p51
    %s54 = sadd.s32 %s53, 1
    %p57 = scmp.eq.s32.totalorder %s19, 1
    %p58 = scmp.ne.s32.totalorder %s53, %s55
    %p59 = scmp.eq.s32.totalorder %s19, 0
    %p60 = por %p58, %p59
    %p61 = scmp.ne.s32.totalorder %s53, %s55
    %p62 = scmp.eq.s32.totalorder %s24, 1
    %p63 = por %p61, %p62
    %p64 = scmp.ne.s32.totalorder %s55, %s56
    %p65 = scmp.eq.s32.totalorder %s24, 0
    %p66 = por %p64, %p65
    %p67 = scmp.ne.s32.totalorder %s55, %s56
    %p68 = scmp.eq.s32.totalorder %s25, 1
    %p69 = por %p67, %p68
    %p71 = scmp.ne.s32.totalorder %s56, %s70
    %p72 = scmp.eq.s32.totalorder %s25, 0
    %p73 = por %p71, %p72
    %s75 = sadd.s32 %s74, 1
    %p78 = scmp.eq.s32.totalorder %s19, 1
    %p79 = scmp.ne.s32.totalorder %s74, %s76
    %p80 = scmp.eq.s32.totalorder %s19, 0
    %p81 = por %p79, %p80
    %p82 = scmp.ne.s32.totalorder %s74, %s76
    %p83 = scmp.eq.s32.totalorder %s24, 1
    %p84 = por %p82, %p83
    %p85 = scmp.ne.s32.totalorder %s76, %s77
    %p86 = scmp.eq.s32.totalorder %s24, 0
    %p87 = por %p85, %p86
    %p88 = scmp.ne.s32.totalorder %s76, %s77
    %p89 = scmp.eq.s32.totalorder %s25, 1
    %p90 = por %p88, %p89
    %p92 = scmp.ne.s32.totalorder %s77, %s91
    %p93 = scmp.eq.s32.totalorder %s25, 0
    %p94 = por %p92, %p93
    %s96 = sadd.s32 %s95, 1
    %p99 = scmp.eq.s32.totalorder %s19, 1
    %p100 = scmp.ne.s32.totalorder %s95, %s97
    %p101 = scmp.eq.s32.totalorder %s19, 0
    %p102 = por %p100, %p101
    %p103 = scmp.ne.s32.totalorder %s95, %s97
    %p104 = scmp.eq.s32.totalorder %s24, 1
    %p105 = por %p103, %p104
    %p106 = scmp.ne.s32.totalorder %s97, %s98
    %p107 = scmp.eq.s32.totalorder %s24, 0
    %p108 = por %p106, %p107
    %p109 = scmp.ne.s32.totalorder %s97, %s98
    %p110 = scmp.eq.s32.totalorder %s25, 1
    %p111 = por %p109, %p110
    %p113 = scmp.ne.s32.totalorder %s98, %s112
    %p114 = scmp.eq.s32.totalorder %s25, 0
    %p115 = por %p113, %p114
    %s117 = sadd.s32 %s116, 1
    %p120 = scmp.eq.s32.totalorder %s19, 1
    %p121 = scmp.ne.s32.totalorder %s116, %s118
    %p122 = scmp.eq.s32.totalorder %s19, 0
    %p123 = por %p121, %p122
    %p124 = scmp.ne.s32.totalorder %s116, %s118
    %p125 = scmp.eq.s32.totalorder %s24, 1
    %p126 = por %p124, %p125
    %p127 = scmp.ne.s32.totalorder %s118, %s119
    %p128 = scmp.eq.s32.totalorder %s24, 0
    %p129 = por %p127, %p128
    %p130 = scmp.ne.s32.totalorder %s118, %s119
    %p131 = scmp.eq.s32.totalorder %s25, 1
    %p132 = por %p130, %p131
    %p134 = scmp.ne.s32.totalorder %s119, %s133
    %p135 = scmp.eq.s32.totalorder %s25, 0
    %p136 = por %p134, %p135
    %s138 = sadd.s32 %s137, 1
    %p141 = scmp.eq.s32.totalorder %s19, 1
    %p142 = scmp.ne.s32.totalorder %s137, %s139
    %p143 = scmp.eq.s32.totalorder %s19, 0
    %p144 = por %p142, %p143
    %p145 = scmp.ne.s32.totalorder %s137, %s139
    %p146 = scmp.eq.s32.totalorder %s24, 1
    %p147 = por %p145, %p146
    %p148 = scmp.ne.s32.totalorder %s139, %s140
    %p149 = scmp.eq.s32.totalorder %s24, 0
    %p150 = por %p148, %p149
    %p151 = scmp.ne.s32.totalorder %s139, %s140
    %p152 = scmp.eq.s32.totalorder %s25, 1
    %p153 = por %p151, %p152
    %p155 = scmp.ne.s32.totalorder %s140, %s154
    %p156 = scmp.eq.s32.totalorder %s25, 0
    %p157 = por %p155, %p156
    %s159 = sadd.s32 %s158, 1
    %p162 = scmp.eq.s32.totalorder %s19, 1
    %p163 = scmp.ne.s32.totalorder %s158, %s160
    %p164 = scmp.eq.s32.totalorder %s19, 0
    %p165 = por %p163, %p164
    %p166 = scmp.ne.s32.totalorder %s158, %s160
    %p167 = scmp.eq.s32.totalorder %s24, 1
    %p168 = por %p166, %p167
    %p169 = scmp.ne.s32.totalorder %s160, %s161
    %p170 = scmp.eq.s32.totalorder %s24, 0
    %p171 = por %p169, %p170
    %p172 = scmp.ne.s32.totalorder %s160, %s161
    %p173 = scmp.eq.s32.totalorder %s25, 1
    %p174 = por %p172, %p173
    %p176 = scmp.ne.s32.totalorder %s161, %s175
    %p177 = scmp.eq.s32.totalorder %s25, 0
    %p178 = por %p176, %p177
    %s180 = sadd.s32 %s179, 1
    %p183 = scmp.eq.s32.totalorder %s19, 1
    %p184 = scmp.ne.s32.totalorder %s179, %s181
    %p185 = scmp.eq.s32.totalorder %s19, 0
    %p186 = por %p184, %p185
    %p187 = scmp.ne.s32.totalorder %s179, %s181
    %p188 = scmp.eq.s32.totalorder %s24, 1
    %p189 = por %p187, %p188
    %p190 = scmp.ne.s32.totalorder %s181, %s182
    %p191 = scmp.eq.s32.totalorder %s24, 0
    %p192 = por %p190, %p191
    %p193 = scmp.ne.s32.totalorder %s181, %s182
    %p194 = scmp.eq.s32.totalorder %s25, 1
    %p195 = por %p193, %p194
    %p197 = scmp.ne.s32.totalorder %s182, %s196
    %p198 = scmp.eq.s32.totalorder %s25, 0
    %p199 = por %p197, %p198
    %s201 = sadd.s32 %s200, 1
    %p204 = scmp.eq.s32.totalorder %s19, 1
    %p205 = scmp.ne.s32.totalorder %s200, %s202
    %p206 = scmp.eq.s32.totalorder %s19, 0
    %p207 = por %p205, %p206
    %p208 = scmp.ne.s32.totalorder %s200, %s202
    %p209 = scmp.eq.s32.totalorder %s24, 1
    %p210 = por %p208, %p209
    %p211 = scmp.ne.s32.totalorder %s202, %s203
    %p212 = scmp.eq.s32.totalorder %s24, 0
    %p213 = por %p211, %p212
    %p214 = scmp.ne.s32.totalorder %s202, %s203
    %p215 = scmp.eq.s32.totalorder %s25, 1
    %p216 = por %p214, %p215
    %p218 = scmp.ne.s32.totalorder %s203, %s217
    %p219 = scmp.eq.s32.totalorder %s25, 0
    %p220 = por %p218, %p219
    %s222 = sadd.s32 %s221, 1
    %p225 = scmp.eq.s32.totalorder %s19, 1
    %p226 = scmp.ne.s32.totalorder %s221, %s223
    %p227 = scmp.eq.s32.totalorder %s19, 0
    %p228 = por %p226, %p227
    %p229 = scmp.ne.s32.totalorder %s221, %s223
    %p230 = scmp.eq.s32.totalorder %s24, 1
    %p231 = por %p229, %p230
    %p232 = scmp.ne.s32.totalorder %s223, %s224
    %p233 = scmp.eq.s32.totalorder %s24, 0
    %p234 = por %p232, %p233
    %p235 = scmp.ne.s32.totalorder %s223, %s224
    %p236 = scmp.eq.s32.totalorder %s25, 1
    %p237 = por %p235, %p236
    %p239 = scmp.ne.s32.totalorder %s224, %s238
    %p240 = scmp.eq.s32.totalorder %s25, 0
    %p241 = por %p239, %p240
    %s243 = sadd.s32 %s242, 1
    %p246 = scmp.eq.s32.totalorder %s19, 1
    %p247 = scmp.ne.s32.totalorder %s242, %s244
    %p248 = scmp.eq.s32.totalorder %s19, 0
    %p249 = por %p247, %p248
    %p250 = scmp.ne.s32.totalorder %s242, %s244
    %p251 = scmp.eq.s32.totalorder %s24, 1
    %p252 = por %p250, %p251
    %p253 = scmp.ne.s32.totalorder %s244, %s245
    %p254 = scmp.eq.s32.totalorder %s24, 0
    %p255 = por %p253, %p254
    %p256 = scmp.ne.s32.totalorder %s244, %s245
    %p257 = scmp.eq.s32.totalorder %s25, 1
    %p258 = por %p256, %p257
    %p260 = scmp.ne.s32.totalorder %s245, %s259
    %p261 = scmp.eq.s32.totalorder %s25, 0
    %p262 = por %p260, %p261
    %s263 = ssub.s32 %s19, %s26
    %p264 = scmp.eq.s32.totalorder %s263, 0
    %s266 = sadd.s32 %s265, 1
    %s267 = scalar_select %p264, %s265, %s266
    %p270 = pneg %p264
    %p271 = scmp.eq.s32.totalorder %s19, 1
    %p272 = por %p270, %p271
    %p273 = scmp.ne.s32.totalorder %s265, %s268
    %p274 = scmp.eq.s32.totalorder %s19, 0
    %p275 = por %p273, %p274
    %p276 = scmp.ne.s32.totalorder %s265, %s268
    %p277 = scmp.eq.s32.totalorder %s24, 1
    %p278 = por %p276, %p277
    %p279 = scmp.ne.s32.totalorder %s268, %s269
    %p280 = scmp.eq.s32.totalorder %s24, 0
    %p281 = por %p279, %p280
    %p282 = scmp.ne.s32.totalorder %s268, %s269
    %p283 = scmp.eq.s32.totalorder %s25, 1
    %p284 = por %p282, %p283
    %p286 = scmp.ne.s32.totalorder %s269, %s285
    %p287 = scmp.eq.s32.totalorder %s25, 0
    %p288 = por %p286, %p287
    %p289 = scmp.le.s32.totalorder 1, %s19
    %p290 = scmp.lt.s32.totalorder %s19, 3
    %p291 = pnand %p289, %p290
    %p292 = pneg %p291
    // Predicated region
    $region9: #{fcnn_forward.1} parent=5 // pred_check
      _
    $region10: #{fcnn_forward.1} parent=5 // pred_check_branch
      %294 = sbr.rel (%p291) target = $region12
    $region11: #{fcnn_forward.1} parent=5 // pred_region
      %s295 = ssub.s32 %s19, 1
      // Predicated region
      $region13: #{fcnn_forward.1} parent=11 // pred_check
        %p296 = pneg %p66
      $region14: #{fcnn_forward.1} parent=11 // pred_check_branch
        %298 = sbr.rel (%p296) target = $region16
      $region15: #{fcnn_forward.1} parent=11 // pred_region
        _
      $region16: #{fcnn_forward.1} parent=11 // pred_fallthru
        _
      // Predicated region
      $region17: #{fcnn_forward.1} parent=11 // pred_check
        %p299 = pneg %p87
      $region18: #{fcnn_forward.1} parent=11 // pred_check_branch
        %301 = sbr.rel (%p299) target = $region20
      $region19: #{fcnn_forward.1} parent=11 // pred_region
        _
      $region20: #{fcnn_forward.1} parent=11 // pred_fallthru
        _
      // Predicated region
      $region21: #{fcnn_forward.1} parent=11 // pred_check
        %p302 = pneg %p108
      $region22: #{fcnn_forward.1} parent=11 // pred_check_branch
        %304 = sbr.rel (%p302) target = $region24
      $region23: #{fcnn_forward.1} parent=11 // pred_region
        _
      $region24: #{fcnn_forward.1} parent=11 // pred_fallthru
        _
      // Predicated region
      $region25: #{fcnn_forward.1} parent=11 // pred_check
        %p305 = pneg %p129
      $region26: #{fcnn_forward.1} parent=11 // pred_check_branch
        %307 = sbr.rel (%p305) target = $region28
      $region27: #{fcnn_forward.1} parent=11 // pred_region
        _
      $region28: #{fcnn_forward.1} parent=11 // pred_fallthru
        _
      // Predicated region
      $region29: #{fcnn_forward.1} parent=11 // pred_check
        %p308 = pneg %p150
      $region30: #{fcnn_forward.1} parent=11 // pred_check_branch
        %310 = sbr.rel (%p308) target = $region32
      $region31: #{fcnn_forward.1} parent=11 // pred_region
        _
      $region32: #{fcnn_forward.1} parent=11 // pred_fallthru
        _
      // Predicated region
      $region33: #{fcnn_forward.1} parent=11 // pred_check
        %p311 = pneg %p171
      $region34: #{fcnn_forward.1} parent=11 // pred_check_branch
        %313 = sbr.rel (%p311) target = $region36
      $region35: #{fcnn_forward.1} parent=11 // pred_region
        _
      $region36: #{fcnn_forward.1} parent=11 // pred_fallthru
        _
      // Predicated region
      $region37: #{fcnn_forward.1} parent=11 // pred_check
        %p314 = pneg %p192
      $region38: #{fcnn_forward.1} parent=11 // pred_check_branch
        %316 = sbr.rel (%p314) target = $region40
      $region39: #{fcnn_forward.1} parent=11 // pred_region
        _
      $region40: #{fcnn_forward.1} parent=11 // pred_fallthru
        _
      // Predicated region
      $region41: #{fcnn_forward.1} parent=11 // pred_check
        %p317 = pneg %p213
      $region42: #{fcnn_forward.1} parent=11 // pred_check_branch
        %319 = sbr.rel (%p317) target = $region44
      $region43: #{fcnn_forward.1} parent=11 // pred_region
        _
      $region44: #{fcnn_forward.1} parent=11 // pred_fallthru
        _
      // Predicated region
      $region45: #{fcnn_forward.1} parent=11 // pred_check
        %p320 = pneg %p234
      $region46: #{fcnn_forward.1} parent=11 // pred_check_branch
        %322 = sbr.rel (%p320) target = $region48
      $region47: #{fcnn_forward.1} parent=11 // pred_region
        _
      $region48: #{fcnn_forward.1} parent=11 // pred_fallthru
        _
      // Predicated region
      $region49: #{fcnn_forward.1} parent=11 // pred_check
        %p323 = pneg %p255
      $region50: #{fcnn_forward.1} parent=11 // pred_check_branch
        %325 = sbr.rel (%p323) target = $region52
      $region51: #{fcnn_forward.1} parent=11 // pred_region
        _
      $region52: #{fcnn_forward.1} parent=11 // pred_fallthru
        _
    $region12: #{fcnn_forward.1} parent=5 // pred_fallthru
      _
    %p326 = scmp.lt.s32.totalorder %s19, 2
    // Predicated region
    $region53: #{fcnn_forward.1} parent=5 // pred_check
      %p327 = pneg %p326
    $region54: #{fcnn_forward.1} parent=5 // pred_check_branch
      %329 = sbr.rel (%p327) target = $region56
    $region55: #{fcnn_forward.1} parent=5 // pred_region
      // Predicated region
      $region57: #{fcnn_forward.1} parent=55 // pred_check
        %p330 = pneg %p39
      $region58: #{fcnn_forward.1} parent=55 // pred_check_branch
        %332 = sbr.rel (%p330) target = $region60
      $region59: #{fcnn_forward.1} parent=55 // pred_region
        %p333 = scmp.lt.s32.totalorder %s19, 1
        %s334 = scalar_select %p333, %s19, 1
        %s335 = smul.addr %s334, 8
        %s336 = scalar_lea.vmem %s0, %s335
      $region60: #{fcnn_forward.1} parent=55 // pred_fallthru
        _
    $region56: #{fcnn_forward.1} parent=5 // pred_fallthru
      _
    %p337 = scmp.le.s32.totalorder 1, %s19
    %p338 = scmp.lt.s32.totalorder %s19, 3
    %p339 = pnand %p337, %p338
    %p340 = pneg %p339
    // Predicated region
    $region61: #{fcnn_forward.1} parent=5 // pred_check
      _
    $region62: #{fcnn_forward.1} parent=5 // pred_check_branch
      %342 = sbr.rel (%p339) target = $region64
    $region63: #{fcnn_forward.1} parent=5 // pred_region
      %s343 = ssub.s32 %s19, 1
      %p344 = scmp.lt.s32.totalorder %s24, 1
      %s345 = scalar_select %p344, %s24, 1
      %s346 = smul.addr %s345, 8
      %s347 = scalar_lea.vmem %s0, %s346
      %p348 = pneg %p45
      %p349 = pneg %p42
      %p350 = pneg %p66
      %p351 = pneg %p63
      %p352 = pneg %p87
      %p353 = pneg %p84
      %p354 = pneg %p108
      %p355 = pneg %p105
      %p356 = pneg %p129
      %p357 = pneg %p126
      %p358 = pneg %p150
      %p359 = pneg %p147
      %p360 = pneg %p171
      %p361 = pneg %p168
      %p362 = pneg %p192
      %p363 = pneg %p189
      %p364 = pneg %p213
      %p365 = pneg %p210
      %p366 = pneg %p234
      %p367 = pneg %p231
      %p368 = pneg %p255
      %p369 = pneg %p252
      %p370 = pneg %p281
      %p371 = pneg %p278
      %p372 = scmp.lt.s32.totalorder %s24, 1
      %s373 = scalar_select %p372, %s24, 1
      %s374 = scalar_lea.vmem %s11, %s373
      %p375 = scmp.lt.s32.totalorder %s24, 1
      %s376 = scalar_select %p375, %s24, 1
      %s377 = smul.addr %s376, 8
      %s378 = scalar_lea.vmem %s0, %s377
      %p379 = scmp.lt.s32.totalorder %s24, 1
      %s380 = scalar_select %p379, %s24, 1
      %s381 = scalar_lea.vmem %s11, %s380
      %v383 = vld [vmem:[%s378] sm:$0xff]
      %v384 = vpack.c.bf16 %v383, %v383
      %v385 = vld [vmem:[%s1] sm:$0xf]
      %v386 = vld [vmem:[%s1 + $0x4] sm:$0xf]
      %v387 = vld [vmem:[%s1 + $0x8] sm:$0xf]
      %v388 = vld [vmem:[%s1 + $0xc] sm:$0xf]
      %v389 = vld [vmem:[%s1 + $0x10] sm:$0xf]
      %v390 = vld [vmem:[%s1 + $0x14] sm:$0xf]
      %v391 = vld [vmem:[%s1 + $0x18] sm:$0xf]
      %v392 = vld [vmem:[%s1 + $0x1c] sm:$0xf]
      %v393 = vld [vmem:[%s2] sm:$0xff]
      %v394 = vld [vmem:[%s2 + $0x8] sm:$0xff]
      %v395 = vld [vmem:[%s2 + $0x10] sm:$0xff]
      %v396 = vld [vmem:[%s2 + $0x18] sm:$0xff]
      %v397 = vld [vmem:[%s2 + $0x20] sm:$0xff]
      %v398 = vld [vmem:[%s2 + $0x28] sm:$0xff]
      %v399 = vld [vmem:[%s2 + $0x30] sm:$0xff]
      %v400 = vld [vmem:[%s2 + $0x38] sm:$0xff]
      %402 = vset.pattern.permute.xlu0 0
      %403 = vperm.xlu0 %402, %v393
      %v404 = vpop.permute.xlu0 %403
      %407 = vset.pattern.permute.xlu0 0
      %408 = vperm.xlu0 %407, %v394
      %v409 = vpop.permute.xlu0 %408
      %412 = vset.pattern.permute.xlu0 0
      %413 = vperm.xlu0 %412, %v395
      %v414 = vpop.permute.xlu0 %413
      %417 = vset.pattern.permute.xlu0 0
      %418 = vperm.xlu0 %417, %v396
      %v419 = vpop.permute.xlu0 %418
      %422 = vset.pattern.permute.xlu0 0
      %423 = vperm.xlu0 %422, %v397
      %v424 = vpop.permute.xlu0 %423
      %427 = vset.pattern.permute.xlu0 0
      %428 = vperm.xlu0 %427, %v398
      %v429 = vpop.permute.xlu0 %428
      %432 = vset.pattern.permute.xlu0 0
      %433 = vperm.xlu0 %432, %v399
      %v434 = vpop.permute.xlu0 %433
      %437 = vset.pattern.permute.xlu0 0
      %438 = vperm.xlu0 %437, %v400
      %v439 = vpop.permute.xlu0 %438
      %v449 = vunpack.c.l.b16 %v385
      %v450 = vunpack.c.l.b16 %v386
      %v451 = vunpack.c.l.b16 %v387
      %v452 = vunpack.c.l.b16 %v388
      %v453 = vunpack.c.l.b16 %v389
      %v454 = vunpack.c.l.b16 %v390
      %v455 = vunpack.c.l.b16 %v391
      %v456 = vunpack.c.l.b16 %v392
      %v457 = vpack.c.b16 %v450, %v449
      %v458 = vpack.c.b16 %v452, %v451
      %v459 = vpack.c.b16 %v454, %v453
      %v460 = vpack.c.b16 %v456, %v455
      %vm461 = vcmask 64512
      %v463 = vsel %vm461, %v457, 0
      %v466 = vsel %vm461, %v458, 0
      %v469 = vsel %vm461, %v459, 0
      %v472 = vsel %vm461, %v460, 0
      %vm474 = vcmask 1043456
      %v476 = vsel %vm474, %v384, 0
      %478 = vmatprep.subr.bf16.mxu0 0
      %479 = vmatpush1.bf16.msra.mxu0 %v476
      %480 = vmatprep.subr.bf16.mxu0 0
      %481 = vmatpush1.bf16.msra.mxu0 0
      %482 = vmatprep.subr.bf16.mxu0 0
      %483 = vmatpush1.bf16.msra.mxu0 0
      %484 = vmatprep.subr.bf16.mxu0 0
      %485 = vmatpush1.bf16.msra.mxu0 0
      %486 = vmatprep.subr.bf16.mxu0 0
      %487 = vmatpush1.bf16.msra.mxu0 0
      %488 = vmatprep.subr.bf16.mxu0 0
      %489 = vmatpush1.bf16.msra.mxu0 0
      %490 = vmatprep.subr.bf16.mxu0 0
      %491 = vmatpush1.bf16.msra.mxu0 0
      %492 = vmatprep.subr.bf16.mxu0 0
      %493 = vmatpush1.bf16.msra.mxu0 0
      %494 = vmatprep.subr.bf16.mxu0 0
      %495 = vmatpush1.bf16.msra.mxu0 0
      %496 = vmatprep.subr.bf16.mxu0 0
      %497 = vmatpush1.bf16.msra.mxu0 0
      %498 = vmatprep.subr.bf16.mxu0 0
      %499 = vmatpush1.bf16.msra.mxu0 0
      %500 = vmatprep.subr.bf16.mxu0 0
      %501 = vmatpush1.bf16.msra.mxu0 0
      %502 = vmatprep.subr.bf16.mxu0 0
      %503 = vmatpush1.bf16.msra.mxu0 0
      %504 = vmatprep.subr.bf16.mxu0 0
      %505 = vmatpush1.bf16.msra.mxu0 0
      %506 = vmatprep.subr.bf16.mxu0 0
      %507 = vmatpush1.bf16.msra.mxu0 0
      %508 = vmatprep.subr.bf16.mxu0 0
      %509 = vmatpush1.bf16.msra.mxu0 0
      %510 = vmatprep.mubr.bf16.mxu0 0
      %511 = vmatmul.mubr.bf16.gmra.mrb[0].mxu0 %v463
      %v512 = vpop.f32.mrb[0].mxu0
      %v513 = vadd.f32 %v404, %v512
      %v514 = vpop.f32.mrb[0].mxu0
      %v515 = vpop.f32.mrb[0].mxu0
      %v516 = vadd.f32 %v409, %v515
      %v517 = vpop.f32.mrb[0].mxu0
      %518 = vmatprep.mubr.bf16.mxu0 0
      %519 = vmatmul.mubr.bf16.gmra.mrb[0].mxu0 %v466
      %v520 = vpop.f32.mrb[0].mxu0
      %v521 = vadd.f32 %v414, %v520
      %v522 = vpop.f32.mrb[0].mxu0
      %v523 = vpop.f32.mrb[0].mxu0
      %v524 = vadd.f32 %v419, %v523
      %v525 = vpop.f32.mrb[0].mxu0
      %526 = vmatprep.mubr.bf16.mxu0 0
      %527 = vmatmul.mubr.bf16.gmra.mrb[0].mxu0 %v469
      %v528 = vpop.f32.mrb[0].mxu0
      %v529 = vadd.f32 %v424, %v528
      %v530 = vpop.f32.mrb[0].mxu0
      %v531 = vpop.f32.mrb[0].mxu0
      %v532 = vadd.f32 %v429, %v531
      %v533 = vpop.f32.mrb[0].mxu0
      %534 = vmatprep.mubr.bf16.mxu0 0
      %535 = vmatmul.mubr.bf16.gmra.mrb[0].mxu0 %v472
      %v536 = vpop.f32.mrb[0].mxu0
      %v537 = vadd.f32 %v434, %v536
      %v538 = vpop.f32.mrb[0].mxu0
      %v539 = vpop.f32.mrb[0].mxu0
      %v540 = vadd.f32 %v439, %v539
      %v541 = vpop.f32.mrb[0].mxu0
      %542 = vdwg.mxu0
      %v543 = vpack.c.bf16 %v516, %v513
      %v544 = vpack.c.bf16 %v524, %v521
      %v545 = vpack.c.bf16 %v532, %v529
      %v546 = vpack.c.bf16 %v540, %v537
      %v547 = vmax.bf16 %v543, 0
      %v548 = vmax.bf16 %v544, 0
      %v549 = vmax.bf16 %v545, 0
      %v550 = vmax.bf16 %v546, 0
      %v551 = vld [vmem:[%s3] sm:$0xf]
      %v552 = vld [vmem:[%s3 + $0x4] sm:$0xf]
      %v553 = vld [vmem:[%s3 + $0x8] sm:$0xf]
      %v554 = vld [vmem:[%s3 + $0xc] sm:$0xf]
      %v555 = vld [vmem:[%s3 + $0x10] sm:$0xf]
      %v556 = vld [vmem:[%s3 + $0x14] sm:$0xf]
      %v557 = vld [vmem:[%s3 + $0x18] sm:$0xf]
      %v558 = vld [vmem:[%s3 + $0x1c] sm:$0xf]
      %v559 = vld [vmem:[%s3 + $0x20] sm:$0xf]
      %v560 = vld [vmem:[%s3 + $0x24] sm:$0xf]
      %v561 = vld [vmem:[%s3 + $0x28] sm:$0xf]
      %v562 = vld [vmem:[%s3 + $0x2c] sm:$0xf]
      %v563 = vld [vmem:[%s3 + $0x30] sm:$0xf]
      %v564 = vld [vmem:[%s3 + $0x34] sm:$0xf]
      %v565 = vld [vmem:[%s3 + $0x38] sm:$0xf]
      %v566 = vld [vmem:[%s3 + $0x3c] sm:$0xf]
      %v567 = vld [vmem:[%s4] sm:$0xff]
      %v568 = vld [vmem:[%s4 + $0x8] sm:$0xff]
      %v569 = vld [vmem:[%s4 + $0x10] sm:$0xff]
      %v570 = vld [vmem:[%s4 + $0x18] sm:$0xff]
      %v571 = vld [vmem:[%s4 + $0x20] sm:$0xff]
      %v572 = vld [vmem:[%s4 + $0x28] sm:$0xff]
      %v573 = vld [vmem:[%s4 + $0x30] sm:$0xff]
      %v574 = vld [vmem:[%s4 + $0x38] sm:$0xff]
      %v575 = vld [vmem:[%s4 + $0x40] sm:$0xff]
      %v576 = vld [vmem:[%s4 + $0x48] sm:$0xff]
      %v577 = vld [vmem:[%s4 + $0x50] sm:$0xff]
      %v578 = vld [vmem:[%s4 + $0x58] sm:$0xff]
      %v579 = vld [vmem:[%s4 + $0x60] sm:$0xff]
      %v580 = vld [vmem:[%s4 + $0x68] sm:$0xff]
      %v581 = vld [vmem:[%s4 + $0x70] sm:$0xff]
      %v582 = vld [vmem:[%s4 + $0x78] sm:$0xff]
      %584 = vset.pattern.permute.xlu0 0
      %585 = vperm.xlu0 %584, %v567
      %v586 = vpop.permute.xlu0 %585
      %589 = vset.pattern.permute.xlu0 0
      %590 = vperm.xlu0 %589, %v568
      %v591 = vpop.permute.xlu0 %590
      %594 = vset.pattern.permute.xlu0 0
      %595 = vperm.xlu0 %594, %v569
      %v596 = vpop.permute.xlu0 %595
      %599 = vset.pattern.permute.xlu0 0
      %600 = vperm.xlu0 %599, %v570
      %v601 = vpop.permute.xlu0 %600
      %604 = vset.pattern.permute.xlu0 0
      %605 = vperm.xlu0 %604, %v571
      %v606 = vpop.permute.xlu0 %605
      %609 = vset.pattern.permute.xlu0 0
      %610 = vperm.xlu0 %609, %v572
      %v611 = vpop.permute.xlu0 %610
      %614 = vset.pattern.permute.xlu0 0
      %615 = vperm.xlu0 %614, %v573
      %v616 = vpop.permute.xlu0 %615
      %619 = vset.pattern.permute.xlu0 0
      %620 = vperm.xlu0 %619, %v574
      %v621 = vpop.permute.xlu0 %620
      %624 = vset.pattern.permute.xlu0 0
      %625 = vperm.xlu0 %624, %v575
      %v626 = vpop.permute.xlu0 %625
      %629 = vset.pattern.permute.xlu0 0
      %630 = vperm.xlu0 %629, %v576
      %v631 = vpop.permute.xlu0 %630
      %634 = vset.pattern.permute.xlu0 0
      %635 = vperm.xlu0 %634, %v577
      %v636 = vpop.permute.xlu0 %635
      %639 = vset.pattern.permute.xlu0 0
      %640 = vperm.xlu0 %639, %v578
      %v641 = vpop.permute.xlu0 %640
      %644 = vset.pattern.permute.xlu0 0
      %645 = vperm.xlu0 %644, %v579
      %v646 = vpop.permute.xlu0 %645
      %649 = vset.pattern.permute.xlu0 0
      %650 = vperm.xlu0 %649, %v580
      %v651 = vpop.permute.xlu0 %650
      %654 = vset.pattern.permute.xlu0 0
      %655 = vperm.xlu0 %654, %v581
      %v656 = vpop.permute.xlu0 %655
      %659 = vset.pattern.permute.xlu0 0
      %660 = vperm.xlu0 %659, %v582
      %v661 = vpop.permute.xlu0 %660
      %v679 = vunpack.c.l.b16 %v551
      %v680 = vunpack.c.l.b16 %v552
      %v681 = vunpack.c.l.b16 %v553
      %v682 = vunpack.c.l.b16 %v554
      %v683 = vunpack.c.l.b16 %v555
      %v684 = vunpack.c.l.b16 %v556
      %v685 = vunpack.c.l.b16 %v557
      %v686 = vunpack.c.l.b16 %v558
      %v687 = vunpack.c.l.b16 %v559
      %v688 = vunpack.c.l.b16 %v560
      %v689 = vunpack.c.l.b16 %v561
      %v690 = vunpack.c.l.b16 %v562
      %v691 = vunpack.c.l.b16 %v563
      %v692 = vunpack.c.l.b16 %v564
      %v693 = vunpack.c.l.b16 %v565
      %v694 = vunpack.c.l.b16 %v566
      %v695 = vpack.c.b16 %v680, %v679
      %v696 = vpack.c.b16 %v682, %v681
      %v697 = vpack.c.b16 %v684, %v683
      %v698 = vpack.c.b16 %v686, %v685
      %v699 = vpack.c.b16 %v688, %v687
      %v700 = vpack.c.b16 %v690, %v689
      %v701 = vpack.c.b16 %v692, %v691
      %v702 = vpack.c.b16 %v694, %v693
      %vm703 = vcmask 523264
      %v705 = vsel %vm703, %v695, 0
      %v708 = vsel %vm703, %v696, 0
      %v711 = vsel %vm703, %v697, 0
      %v714 = vsel %vm703, %v698, 0
      %v717 = vsel %vm703, %v699, 0
      %v720 = vsel %vm703, %v700, 0
      %v723 = vsel %vm703, %v701, 0
      %v726 = vsel %vm703, %v702, 0
      %728 = vmatprep.subr.bf16.mxu0 0
      %729 = vmatpush1.bf16.msra.mxu0 %v547
      %730 = vmatprep.subr.bf16.mxu0 0
      %731 = vmatpush1.bf16.msra.mxu0 %v548
      %732 = vmatprep.subr.bf16.mxu0 0
      %733 = vmatpush1.bf16.msra.mxu0 %v549
      %734 = vmatprep.subr.bf16.mxu0 0
      %735 = vmatpush1.bf16.msra.mxu0 %v550
      %736 = vmatprep.subr.bf16.mxu0 0
      %737 = vmatpush1.bf16.msra.mxu0 0
      %738 = vmatprep.subr.bf16.mxu0 0
      %739 = vmatpush1.bf16.msra.mxu0 0
      %740 = vmatprep.subr.bf16.mxu0 0
      %741 = vmatpush1.bf16.msra.mxu0 0
      %742 = vmatprep.subr.bf16.mxu0 0
      %743 = vmatpush1.bf16.msra.mxu0 0
      %744 = vmatprep.subr.bf16.mxu0 0
      %745 = vmatpush1.bf16.msra.mxu0 0
      %746 = vmatprep.subr.bf16.mxu0 0
      %747 = vmatpush1.bf16.msra.mxu0 0
      %748 = vmatprep.subr.bf16.mxu0 0
      %749 = vmatpush1.bf16.msra.mxu0 0
      %750 = vmatprep.subr.bf16.mxu0 0
      %751 = vmatpush1.bf16.msra.mxu0 0
      %752 = vmatprep.subr.bf16.mxu0 0
      %753 = vmatpush1.bf16.msra.mxu0 0
      %754 = vmatprep.subr.bf16.mxu0 0
      %755 = vmatpush1.bf16.msra.mxu0 0
      %756 = vmatprep.subr.bf16.mxu0 0
      %757 = vmatpush1.bf16.msra.mxu0 0
      %758 = vmatprep.subr.bf16.mxu0 0
      %759 = vmatpush1.bf16.msra.mxu0 0
      %760 = vmatprep.mubr.bf16.mxu0 0
      %761 = vmatmul.mubr.bf16.gmra.mrb[0].mxu0 %v705
      %v762 = vpop.f32.mrb[0].mxu0
      %v763 = vadd.f32 %v586, %v762
      %v764 = vpop.f32.mrb[0].mxu0
      %v765 = vpop.f32.mrb[0].mxu0
      %v766 = vadd.f32 %v591, %v765
      %v767 = vpop.f32.mrb[0].mxu0
      %768 = vmatprep.mubr.bf16.mxu0 0
      %769 = vmatmul.mubr.bf16.gmra.mrb[0].mxu0 %v708
      %v770 = vpop.f32.mrb[0].mxu0
      %v771 = vadd.f32 %v596, %v770
      %v772 = vpop.f32.mrb[0].mxu0
      %v773 = vpop.f32.mrb[0].mxu0
      %v774 = vadd.f32 %v601, %v773
      %v775 = vpop.f32.mrb[0].mxu0
      %776 = vmatprep.mubr.bf16.mxu0 0
      %777 = vmatmul.mubr.bf16.gmra.mrb[0].mxu0 %v711
      %v778 = vpop.f32.mrb[0].mxu0
      %v779 = vadd.f32 %v606, %v778
      %v780 = vpop.f32.mrb[0].mxu0
      %v781 = vpop.f32.mrb[0].mxu0
      %v782 = vadd.f32 %v611, %v781
      %v783 = vpop.f32.mrb[0].mxu0
      %784 = vmatprep.mubr.bf16.mxu0 0
      %785 = vmatmul.mubr.bf16.gmra.mrb[0].mxu0 %v714
      %v786 = vpop.f32.mrb[0].mxu0
      %v787 = vadd.f32 %v616, %v786
      %v788 = vpop.f32.mrb[0].mxu0
      %v789 = vpop.f32.mrb[0].mxu0
      %v790 = vadd.f32 %v621, %v789
      %v791 = vpop.f32.mrb[0].mxu0
      %792 = vmatprep.mubr.bf16.mxu0 0
      %793 = vmatmul.mubr.bf16.gmra.mrb[0].mxu0 %v717
      %v794 = vpop.f32.mrb[0].mxu0
      %v795 = vadd.f32 %v626, %v794
      %v796 = vpop.f32.mrb[0].mxu0
      %v797 = vpop.f32.mrb[0].mxu0
      %v798 = vadd.f32 %v631, %v797
      %v799 = vpop.f32.mrb[0].mxu0
      %800 = vmatprep.mubr.bf16.mxu0 0
      %801 = vmatmul.mubr.bf16.gmra.mrb[0].mxu0 %v720
      %v802 = vpop.f32.mrb[0].mxu0
      %v803 = vadd.f32 %v636, %v802
      %v804 = vpop.f32.mrb[0].mxu0
      %v805 = vpop.f32.mrb[0].mxu0
      %v806 = vadd.f32 %v641, %v805
      %v807 = vpop.f32.mrb[0].mxu0
      %808 = vmatprep.mubr.bf16.mxu0 0
      %809 = vmatmul.mubr.bf16.gmra.mrb[0].mxu0 %v723
      %v810 = vpop.f32.mrb[0].mxu0
      %v811 = vadd.f32 %v646, %v810
      %v812 = vpop.f32.mrb[0].mxu0
      %v813 = vpop.f32.mrb[0].mxu0
      %v814 = vadd.f32 %v651, %v813
      %v815 = vpop.f32.mrb[0].mxu0
      %816 = vmatprep.mubr.bf16.mxu0 0
      %817 = vmatmul.mubr.bf16.gmra.mrb[0].mxu0 %v726
      %v818 = vpop.f32.mrb[0].mxu0
      %v819 = vadd.f32 %v656, %v818
      %v820 = vpop.f32.mrb[0].mxu0
      %v821 = vpop.f32.mrb[0].mxu0
      %v822 = vadd.f32 %v661, %v821
      %v823 = vpop.f32.mrb[0].mxu0
      %824 = vdwg.mxu0
      %v825 = vpack.c.bf16 %v766, %v763
      %v826 = vpack.c.bf16 %v774, %v771
      %v827 = vpack.c.bf16 %v782, %v779
      %v828 = vpack.c.bf16 %v790, %v787
      %v829 = vpack.c.bf16 %v798, %v795
      %v830 = vpack.c.bf16 %v806, %v803
      %v831 = vpack.c.bf16 %v814, %v811
      %v832 = vpack.c.bf16 %v822, %v819
      %v833 = vmax.bf16 %v825, 0
      %v834 = vmax.bf16 %v826, 0
      %v835 = vmax.bf16 %v827, 0
      %v836 = vmax.bf16 %v828, 0
      %v837 = vmax.bf16 %v829, 0
      %v838 = vmax.bf16 %v830, 0
      %v839 = vmax.bf16 %v831, 0
      %v840 = vmax.bf16 %v832, 0
      %v841 = vld [vmem:[%s5] sm:$0xf]
      %v842 = vld [vmem:[%s5 + $0x4] sm:$0xf]
      %v843 = vld [vmem:[%s5 + $0x8] sm:$0xf]
      %v844 = vld [vmem:[%s5 + $0xc] sm:$0xf]
      %v845 = vld [vmem:[%s5 + $0x10] sm:$0xf]
      %v846 = vld [vmem:[%s5 + $0x14] sm:$0xf]
      %v847 = vld [vmem:[%s5 + $0x18] sm:$0xf]
      %v848 = vld [vmem:[%s5 + $0x1c] sm:$0xf]
      %v849 = vld [vmem:[%s5 + $0x20] sm:$0xf]
      %v850 = vld [vmem:[%s5 + $0x24] sm:$0xf]
      %v851 = vld [vmem:[%s5 + $0x28] sm:$0xf]
      %v852 = vld [vmem:[%s5 + $0x2c] sm:$0xf]
      %v853 = vld [vmem:[%s5 + $0x30] sm:$0xf]
      %v854 = vld [vmem:[%s5 + $0x34] sm:$0xf]
      %v855 = vld [vmem:[%s5 + $0x38] sm:$0xf]
      %v856 = vld [vmem:[%s5 + $0x3c] sm:$0xf]
      %v857 = vld [vmem:[%s5 + $0x40] sm:$0xf]
      %v858 = vld [vmem:[%s5 + $0x44] sm:$0xf]
      %v859 = vld [vmem:[%s5 + $0x48] sm:$0xf]
      %v860 = vld [vmem:[%s5 + $0x4c] sm:$0xf]
      %v861 = vld [vmem:[%s5 + $0x50] sm:$0xf]
      %v862 = vld [vmem:[%s5 + $0x54] sm:$0xf]
      %v863 = vld [vmem:[%s5 + $0x58] sm:$0xf]
      %v864 = vld [vmem:[%s5 + $0x5c] sm:$0xf]
      %v865 = vld [vmem:[%s5 + $0x60] sm:$0xf]
      %v866 = vld [vmem:[%s5 + $0x64] sm:$0xf]
      %v867 = vld [vmem:[%s5 + $0x68] sm:$0xf]
      %v868 = vld [vmem:[%s5 + $0x6c] sm:$0xf]
      %v869 = vld [vmem:[%s5 + $0x70] sm:$0xf]
      %v870 = vld [vmem:[%s5 + $0x74] sm:$0xf]
      %v871 = vld [vmem:[%s5 + $0x78] sm:$0xf]
      %v872 = vld [vmem:[%s5 + $0x7c] sm:$0xf]
      %v873 = vld [vmem:[%s6] sm:$0xff]
      %v874 = vld [vmem:[%s6 + $0x8] sm:$0xff]
      %v875 = vld [vmem:[%s6 + $0x10] sm:$0xff]
      %v876 = vld [vmem:[%s6 + $0x18] sm:$0xff]
      %v877 = vld [vmem:[%s6 + $0x20] sm:$0xff]
      %v878 = vld [vmem:[%s6 + $0x28] sm:$0xff]
      %v879 = vld [vmem:[%s6 + $0x30] sm:$0xff]
      %v880 = vld [vmem:[%s6 + $0x38] sm:$0xff]
      %v881 = vld [vmem:[%s6 + $0x40] sm:$0xff]
      %v882 = vld [vmem:[%s6 + $0x48] sm:$0xff]
      %v883 = vld [vmem:[%s6 + $0x50] sm:$0xff]
      %v884 = vld [vmem:[%s6 + $0x58] sm:$0xff]
      %v885 = vld [vmem:[%s6 + $0x60] sm:$0xff]
      %v886 = vld [vmem:[%s6 + $0x68] sm:$0xff]
      %v887 = vld [vmem:[%s6 + $0x70] sm:$0xff]
      %v888 = vld [vmem:[%s6 + $0x78] sm:$0xff]
      %v889 = vld [vmem:[%s6 + $0x80] sm:$0xff]
      %v890 = vld [vmem:[%s6 + $0x88] sm:$0xff]
      %v891 = vld [vmem:[%s6 + $0x90] sm:$0xff]
      %v892 = vld [vmem:[%s6 + $0x98] sm:$0xff]
      %v893 = vld [vmem:[%s6 + $0xa0] sm:$0xff]
      %v894 = vld [vmem:[%s6 + $0xa8] sm:$0xff]
      %v895 = vld [vmem:[%s6 + $0xb0] sm:$0xff]
      %v896 = vld [vmem:[%s6 + $0xb8] sm:$0xff]
      %v897 = vld [vmem:[%s6 + $0xc0] sm:$0xff]
      %v898 = vld [vmem:[%s6 + $0xc8] sm:$0xff]
      %v899 = vld [vmem:[%s6 + $0xd0] sm:$0xff]
      %v900 = vld [vmem:[%s6 + $0xd8] sm:$0xff]
      %v901 = vld [vmem:[%s6 + $0xe0] sm:$0xff]
      %v902 = vld [vmem:[%s6 + $0xe8] sm:$0xff]
      %v903 = vld [vmem:[%s6 + $0xf0] sm:$0xff]
      %v904 = vld [vmem:[%s6 + $0xf8] sm:$0xff]
      %906 = vset.pattern.permute.xlu0 0
      %907 = vperm.xlu0 %906, %v873
      %v908 = vpop.permute.xlu0 %907
      %911 = vset.pattern.permute.xlu0 0
      %912 = vperm.xlu0 %911, %v874
      %v913 = vpop.permute.xlu0 %912
      %916 = vset.pattern.permute.xlu0 0
      %917 = vperm.xlu0 %916, %v875
      %v918 = vpop.permute.xlu0 %917
      %921 = vset.pattern.permute.xlu0 0
      %922 = vperm.xlu0 %921, %v876
      %v923 = vpop.permute.xlu0 %922
      %926 = vset.pattern.permute.xlu0 0
      %927 = vperm.xlu0 %926, %v877
      %v928 = vpop.permute.xlu0 %927
      %931 = vset.pattern.permute.xlu0 0
      %932 = vperm.xlu0 %931, %v878
      %v933 = vpop.permute.xlu0 %932
      %936 = vset.pattern.permute.xlu0 0
      %937 = vperm.xlu0 %936, %v879
      %v938 = vpop.permute.xlu0 %937
      %941 = vset.pattern.permute.xlu0 0
      %942 = vperm.xlu0 %941, %v880
      %v943 = vpop.permute.xlu0 %942
      %946 = vset.pattern.permute.xlu0 0
      %947 = vperm.xlu0 %946, %v881
      %v948 = vpop.permute.xlu0 %947
      %951 = vset.pattern.permute.xlu0 0
      %952 = vperm.xlu0 %951, %v882
      %v953 = vpop.permute.xlu0 %952
      %956 = vset.pattern.permute.xlu0 0
      %957 = vperm.xlu0 %956, %v883
      %v958 = vpop.permute.xlu0 %957
      %961 = vset.pattern.permute.xlu0 0
      %962 = vperm.xlu0 %961, %v884
      %v963 = vpop.permute.xlu0 %962
      %966 = vset.pattern.permute.xlu0 0
      %967 = vperm.xlu0 %966, %v885
      %v968 = vpop.permute.xlu0 %967
      %971 = vset.pattern.permute.xlu0 0
      %972 = vperm.xlu0 %971, %v886
      %v973 = vpop.permute.xlu0 %972
      %976 = vset.pattern.permute.xlu0 0
      %977 = vperm.xlu0 %976, %v887
      %v978 = vpop.permute.xlu0 %977
      %981 = vset.pattern.permute.xlu0 0
      %982 = vperm.xlu0 %981, %v888
      %v983 = vpop.permute.xlu0 %982
      %986 = vset.pattern.permute.xlu0 0
      %987 = vperm.xlu0 %986, %v889
      %v988 = vpop.permute.xlu0 %987
      %991 = vset.pattern.permute.xlu0 0
      %992 = vperm.xlu0 %991, %v890
      %v993 = vpop.permute.xlu0 %992
      %996 = vset.pattern.permute.xlu0 0
      %997 = vperm.xlu0 %996, %v891
      %v998 = vpop.permute.xlu0 %997
      %1001 = vset.pattern.permute.xlu0 0
      %1002 = vperm.xlu0 %1001, %v892
      %v1003 = vpop.permute.xlu0 %1002
      %1006 = vset.pattern.permute.xlu0 0
      %1007 = vperm.xlu0 %1006, %v893
      %v1008 = vpop.permute.xlu0 %1007
      %1011 = vset.pattern.permute.xlu0 0
      %1012 = vperm.xlu0 %1011, %v894
      %v1013 = vpop.permute.xlu0 %1012
      %1016 = vset.pattern.permute.xlu0 0
      %1017 = vperm.xlu0 %1016, %v895
      %v1018 = vpop.permute.xlu0 %1017
      %1021 = vset.pattern.permute.xlu0 0
      %1022 = vperm.xlu0 %1021, %v896
      %v1023 = vpop.permute.xlu0 %1022
      %1026 = vset.pattern.permute.xlu0 0
      %1027 = vperm.xlu0 %1026, %v897
      %v1028 = vpop.permute.xlu0 %1027
      %1031 = vset.pattern.permute.xlu0 0
      %1032 = vperm.xlu0 %1031, %v898
      %v1033 = vpop.permute.xlu0 %1032
      %1036 = vset.pattern.permute.xlu0 0
      %1037 = vperm.xlu0 %1036, %v899
      %v1038 = vpop.permute.xlu0 %1037
      %1041 = vset.pattern.permute.xlu0 0
      %1042 = vperm.xlu0 %1041, %v900
      %v1043 = vpop.permute.xlu0 %1042
      %1046 = vset.pattern.permute.xlu0 0
      %1047 = vperm.xlu0 %1046, %v901
      %v1048 = vpop.permute.xlu0 %1047
      %1051 = vset.pattern.permute.xlu0 0
      %1052 = vperm.xlu0 %1051, %v902
      %v1053 = vpop.permute.xlu0 %1052
      %1056 = vset.pattern.permute.xlu0 0
      %1057 = vperm.xlu0 %1056, %v903
      %v1058 = vpop.permute.xlu0 %1057
      %1061 = vset.pattern.permute.xlu0 0
      %1062 = vperm.xlu0 %1061, %v904
      %v1063 = vpop.permute.xlu0 %1062
      %v1097 = vunpack.c.l.b16 %v841
      %v1098 = vunpack.c.l.b16 %v842
      %v1099 = vunpack.c.l.b16 %v843
      %v1100 = vunpack.c.l.b16 %v844
      %v1101 = vunpack.c.l.b16 %v845
      %v1102 = vunpack.c.l.b16 %v846
      %v1103 = vunpack.c.l.b16 %v847
      %v1104 = vunpack.c.l.b16 %v848
      %v1105 = vunpack.c.l.b16 %v849
      %v1106 = vunpack.c.l.b16 %v850
      %v1107 = vunpack.c.l.b16 %v851
      %v1108 = vunpack.c.l.b16 %v852
      %v1109 = vunpack.c.l.b16 %v853
      %v1110 = vunpack.c.l.b16 %v854
      %v1111 = vunpack.c.l.b16 %v855
      %v1112 = vunpack.c.l.b16 %v856
      %v1113 = vunpack.c.l.b16 %v857
      %v1114 = vunpack.c.l.b16 %v858
      %v1115 = vunpack.c.l.b16 %v859
      %v1116 = vunpack.c.l.b16 %v860
      %v1117 = vunpack.c.l.b16 %v861
      %v1118 = vunpack.c.l.b16 %v862
      %v1119 = vunpack.c.l.b16 %v863
      %v1120 = vunpack.c.l.b16 %v864
      %v1121 = vunpack.c.l.b16 %v865
      %v1122 = vunpack.c.l.b16 %v866
      %v1123 = vunpack.c.l.b16 %v867
      %v1124 = vunpack.c.l.b16 %v868
      %v1125 = vunpack.c.l.b16 %v869
      %v1126 = vunpack.c.l.b16 %v870
      %v1127 = vunpack.c.l.b16 %v871
      %v1128 = vunpack.c.l.b16 %v872
      %v1129 = vpack.c.b16 %v1098, %v1097
      %v1130 = vpack.c.b16 %v1100, %v1099
      %v1131 = vpack.c.b16 %v1102, %v1101
      %v1132 = vpack.c.b16 %v1104, %v1103
      %v1133 = vpack.c.b16 %v1106, %v1105
      %v1134 = vpack.c.b16 %v1108, %v1107
      %v1135 = vpack.c.b16 %v1110, %v1109
      %v1136 = vpack.c.b16 %v1112, %v1111
      %v1137 = vpack.c.b16 %v1114, %v1113
      %v1138 = vpack.c.b16 %v1116, %v1115
      %v1139 = vpack.c.b16 %v1118, %v1117
      %v1140 = vpack.c.b16 %v1120, %v1119
      %v1141 = vpack.c.b16 %v1122, %v1121
      %v1142 = vpack.c.b16 %v1124, %v1123
      %v1143 = vpack.c.b16 %v1126, %v1125
      %v1144 = vpack.c.b16 %v1128, %v1127
      %1161 = vmatprep.subr.bf16.mxu0 0
      %1162 = vmatpush1.bf16.msra.mxu0 %v833
      %1163 = vmatprep.subr.bf16.mxu0 0
      %1164 = vmatpush1.bf16.msra.mxu0 %v834
      %1165 = vmatprep.subr.bf16.mxu0 0
      %1166 = vmatpush1.bf16.msra.mxu0 %v835
      %1167 = vmatprep.subr.bf16.mxu0 0
      %1168 = vmatpush1.bf16.msra.mxu0 %v836
      %1169 = vmatprep.subr.bf16.mxu0 0
      %1170 = vmatpush1.bf16.msra.mxu0 %v837
      %1171 = vmatprep.subr.bf16.mxu0 0
      %1172 = vmatpush1.bf16.msra.mxu0 %v838
      %1173 = vmatprep.subr.bf16.mxu0 0
      %1174 = vmatpush1.bf16.msra.mxu0 %v839
      %1175 = vmatprep.subr.bf16.mxu0 0
      %1176 = vmatpush1.bf16.msra.mxu0 %v840
      %1177 = vmatprep.subr.bf16.mxu0 0
      %1178 = vmatpush1.bf16.msra.mxu0 0
      %1179 = vmatprep.subr.bf16.mxu0 0
      %1180 = vmatpush1.bf16.msra.mxu0 0
      %1181 = vmatprep.subr.bf16.mxu0 0
      %1182 = vmatpush1.bf16.msra.mxu0 0
      %1183 = vmatprep.subr.bf16.mxu0 0
      %1184 = vmatpush1.bf16.msra.mxu0 0
      %1185 = vmatprep.subr.bf16.mxu0 0
      %1186 = vmatpush1.bf16.msra.mxu0 0
      %1187 = vmatprep.subr.bf16.mxu0 0
      %1188 = vmatpush1.bf16.msra.mxu0 0
      %1189 = vmatprep.subr.bf16.mxu0 0
      %1190 = vmatpush1.bf16.msra.mxu0 0
      %1191 = vmatprep.subr.bf16.mxu0 0
      %1192 = vmatpush1.bf16.msra.mxu0 0
      %1193 = vmatprep.mubr.bf16.mxu0 0
      %1194 = vmatmul.mubr.bf16.gmra.mrb[0].mxu0 %v1129
      %v1195 = vpop.f32.mrb[0].mxu0
      %v1196 = vadd.f32 %v908, %v1195
      %v1197 = vpop.f32.mrb[0].mxu0
      %v1198 = vpop.f32.mrb[0].mxu0
      %v1199 = vadd.f32 %v913, %v1198
      %v1200 = vpop.f32.mrb[0].mxu0
      %1201 = vmatprep.mubr.bf16.mxu0 0
      %1202 = vmatmul.mubr.bf16.gmra.mrb[0].mxu0 %v1130
      %v1203 = vpop.f32.mrb[0].mxu0
      %v1204 = vadd.f32 %v918, %v1203
      %v1205 = vpop.f32.mrb[0].mxu0
      %v1206 = vpop.f32.mrb[0].mxu0
      %v1207 = vadd.f32 %v923, %v1206
      %v1208 = vpop.f32.mrb[0].mxu0
      %1209 = vmatprep.mubr.bf16.mxu0 0
      %1210 = vmatmul.mubr.bf16.gmra.mrb[0].mxu0 %v1131
      %v1211 = vpop.f32.mrb[0].mxu0
      %v1212 = vadd.f32 %v928, %v1211
      %v1213 = vpop.f32.mrb[0].mxu0
      %v1214 = vpop.f32.mrb[0].mxu0
      %v1215 = vadd.f32 %v933, %v1214
      %v1216 = vpop.f32.mrb[0].mxu0
      %1217 = vmatprep.mubr.bf16.mxu0 0
      %1218 = vmatmul.mubr.bf16.gmra.mrb[0].mxu0 %v1132
      %v1219 = vpop.f32.mrb[0].mxu0
      %v1220 = vadd.f32 %v938, %v1219
      %v1221 = vpop.f32.mrb[0].mxu0
      %v1222 = vpop.f32.mrb[0].mxu0
      %v1223 = vadd.f32 %v943, %v1222
      %v1224 = vpop.f32.mrb[0].mxu0
      %1225 = vmatprep.mubr.bf16.mxu0 0
      %1226 = vmatmul.mubr.bf16.gmra.mrb[0].mxu0 %v1133
      %v1227 = vpop.f32.mrb[0].mxu0
      %v1228 = vadd.f32 %v948, %v1227
      %v1229 = vpop.f32.mrb[0].mxu0
      %v1230 = vpop.f32.mrb[0].mxu0
      %v1231 = vadd.f32 %v953, %v1230
      %v1232 = vpop.f32.mrb[0].mxu0
      %1233 = vmatprep.mubr.bf16.mxu0 0
      %1234 = vmatmul.mubr.bf16.gmra.mrb[0].mxu0 %v1134
      %v1235 = vpop.f32.mrb[0].mxu0
      %v1236 = vadd.f32 %v958, %v1235
      %v1237 = vpop.f32.mrb[0].mxu0
      %v1238 = vpop.f32.mrb[0].mxu0
      %v1239 = vadd.f32 %v963, %v1238
      %v1240 = vpop.f32.mrb[0].mxu0
      %1241 = vmatprep.mubr.bf16.mxu0 0
      %1242 = vmatmul.mubr.bf16.gmra.mrb[0].mxu0 %v1135
      %v1243 = vpop.f32.mrb[0].mxu0
      %v1244 = vadd.f32 %v968, %v1243
      %v1245 = vpop.f32.mrb[0].mxu0
      %v1246 = vpop.f32.mrb[0].mxu0
      %v1247 = vadd.f32 %v973, %v1246
      %v1248 = vpop.f32.mrb[0].mxu0
      %1249 = vmatprep.mubr.bf16.mxu0 0
      %1250 = vmatmul.mubr.bf16.gmra.mrb[0].mxu0 %v1136
      %v1251 = vpop.f32.mrb[0].mxu0
      %v1252 = vadd.f32 %v978, %v1251
      %v1253 = vpop.f32.mrb[0].mxu0
      %v1254 = vpop.f32.mrb[0].mxu0
      %v1255 = vadd.f32 %v983, %v1254
      %v1256 = vpop.f32.mrb[0].mxu0
      %1257 = vmatprep.mubr.bf16.mxu0 0
      %1258 = vmatmul.mubr.bf16.gmra.mrb[0].mxu0 %v1137
      %v1259 = vpop.f32.mrb[0].mxu0
      %v1260 = vadd.f32 %v988, %v1259
      %v1261 = vpop.f32.mrb[0].mxu0
      %v1262 = vpop.f32.mrb[0].mxu0
      %v1263 = vadd.f32 %v993, %v1262
      %v1264 = vpop.f32.mrb[0].mxu0
      %1265 = vmatprep.mubr.bf16.mxu0 0
      %1266 = vmatmul.mubr.bf16.gmra.mrb[0].mxu0 %v1138
      %v1267 = vpop.f32.mrb[0].mxu0
      %v1268 = vadd.f32 %v998, %v1267
      %v1269 = vpop.f32.mrb[0].mxu0
      %v1270 = vpop.f32.mrb[0].mxu0
      %v1271 = vadd.f32 %v1003, %v1270
      %v1272 = vpop.f32.mrb[0].mxu0
      %1273 = vmatprep.mubr.bf16.mxu0 0
      %1274 = vmatmul.mubr.bf16.gmra.mrb[0].mxu0 %v1139
      %v1275 = vpop.f32.mrb[0].mxu0
      %v1276 = vadd.f32 %v1008, %v1275
      %v1277 = vpop.f32.mrb[0].mxu0
      %v1278 = vpop.f32.mrb[0].mxu0
      %v1279 = vadd.f32 %v1013, %v1278
      %v1280 = vpop.f32.mrb[0].mxu0
      %1281 = vmatprep.mubr.bf16.mxu0 0
      %1282 = vmatmul.mubr.bf16.gmra.mrb[0].mxu0 %v1140
      %v1283 = vpop.f32.mrb[0].mxu0
      %v1284 = vadd.f32 %v1018, %v1283
      %v1285 = vpop.f32.mrb[0].mxu0
      %v1286 = vpop.f32.mrb[0].mxu0
      %v1287 = vadd.f32 %v1023, %v1286
      %v1288 = vpop.f32.mrb[0].mxu0
      %1289 = vmatprep.mubr.bf16.mxu0 0
      %1290 = vmatmul.mubr.bf16.gmra.mrb[0].mxu0 %v1141
      %v1291 = vpop.f32.mrb[0].mxu0
      %v1292 = vadd.f32 %v1028, %v1291
      %v1293 = vpop.f32.mrb[0].mxu0
      %v1294 = vpop.f32.mrb[0].mxu0
      %v1295 = vadd.f32 %v1033, %v1294
      %v1296 = vpop.f32.mrb[0].mxu0
      %1297 = vmatprep.mubr.bf16.mxu0 0
      %1298 = vmatmul.mubr.bf16.gmra.mrb[0].mxu0 %v1142
      %v1299 = vpop.f32.mrb[0].mxu0
      %v1300 = vadd.f32 %v1038, %v1299
      %v1301 = vpop.f32.mrb[0].mxu0
      %v1302 = vpop.f32.mrb[0].mxu0
      %v1303 = vadd.f32 %v1043, %v1302
      %v1304 = vpop.f32.mrb[0].mxu0
      %1305 = vmatprep.mubr.bf16.mxu0 0
      %1306 = vmatmul.mubr.bf16.gmra.mrb[0].mxu0 %v1143
      %v1307 = vpop.f32.mrb[0].mxu0
      %v1308 = vadd.f32 %v1048, %v1307
      %v1309 = vpop.f32.mrb[0].mxu0
      %v1310 = vpop.f32.mrb[0].mxu0
      %v1311 = vadd.f32 %v1053, %v1310
      %v1312 = vpop.f32.mrb[0].mxu0
      %1313 = vmatprep.mubr.bf16.mxu0 0
      %1314 = vmatmul.mubr.bf16.gmra.mrb[0].mxu0 %v1144
      %v1315 = vpop.f32.mrb[0].mxu0
      %v1316 = vadd.f32 %v1058, %v1315
      %v1317 = vpop.f32.mrb[0].mxu0
      %v1318 = vpop.f32.mrb[0].mxu0
      %v1319 = vadd.f32 %v1063, %v1318
      %v1320 = vpop.f32.mrb[0].mxu0
      %1321 = vdwg.mxu0
      %v1322 = vpack.c.bf16 %v1199, %v1196
      %v1323 = vpack.c.bf16 %v1207, %v1204
      %v1324 = vpack.c.bf16 %v1215, %v1212
      %v1325 = vpack.c.bf16 %v1223, %v1220
      %v1326 = vpack.c.bf16 %v1231, %v1228
      %v1327 = vpack.c.bf16 %v1239, %v1236
      %v1328 = vpack.c.bf16 %v1247, %v1244
      %v1329 = vpack.c.bf16 %v1255, %v1252
      %v1330 = vpack.c.bf16 %v1263, %v1260
      %v1331 = vpack.c.bf16 %v1271, %v1268
      %v1332 = vpack.c.bf16 %v1279, %v1276
      %v1333 = vpack.c.bf16 %v1287, %v1284
      %v1334 = vpack.c.bf16 %v1295, %v1292
      %v1335 = vpack.c.bf16 %v1303, %v1300
      %v1336 = vpack.c.bf16 %v1311, %v1308
      %v1337 = vpack.c.bf16 %v1319, %v1316
      %v1338 = vmax.bf16 %v1322, 0
      %v1339 = vmax.bf16 %v1323, 0
      %v1340 = vmax.bf16 %v1324, 0
      %v1341 = vmax.bf16 %v1325, 0
      %v1342 = vmax.bf16 %v1326, 0
      %v1343 = vmax.bf16 %v1327, 0
      %v1344 = vmax.bf16 %v1328, 0
      %v1345 = vmax.bf16 %v1329, 0
      %v1346 = vmax.bf16 %v1330, 0
      %v1347 = vmax.bf16 %v1331, 0
      %v1348 = vmax.bf16 %v1332, 0
      %v1349 = vmax.bf16 %v1333, 0
      %v1350 = vmax.bf16 %v1334, 0
      %v1351 = vmax.bf16 %v1335, 0
      %v1352 = vmax.bf16 %v1336, 0
      %v1353 = vmax.bf16 %v1337, 0
      %v1354 = vld [vmem:[%s7] sm:$0xff]
      %v1355 = vld [vmem:[%s7 + $0x8] sm:$0xff]
      %v1356 = vld [vmem:[%s7 + $0x10] sm:$0xff]
      %v1357 = vld [vmem:[%s7 + $0x18] sm:$0xff]
      %v1358 = vld [vmem:[%s7 + $0x20] sm:$0xff]
      %v1359 = vld [vmem:[%s7 + $0x28] sm:$0xff]
      %v1360 = vld [vmem:[%s7 + $0x30] sm:$0xff]
      %v1361 = vld [vmem:[%s7 + $0x38] sm:$0xff]
      %v1362 = vld [vmem:[%s7 + $0x40] sm:$0xff]
      %v1363 = vld [vmem:[%s7 + $0x48] sm:$0xff]
      %v1364 = vld [vmem:[%s7 + $0x50] sm:$0xff]
      %v1365 = vld [vmem:[%s7 + $0x58] sm:$0xff]
      %v1366 = vld [vmem:[%s7 + $0x60] sm:$0xff]
      %v1367 = vld [vmem:[%s7 + $0x68] sm:$0xff]
      %v1368 = vld [vmem:[%s7 + $0x70] sm:$0xff]
      %v1369 = vld [vmem:[%s7 + $0x78] sm:$0xff]
      %v1370 = vld [vmem:[%s7 + $0x80] sm:$0xff]
      %v1371 = vld [vmem:[%s7 + $0x88] sm:$0xff]
      %v1372 = vld [vmem:[%s7 + $0x90] sm:$0xff]
      %v1373 = vld [vmem:[%s7 + $0x98] sm:$0xff]
      %v1374 = vld [vmem:[%s7 + $0xa0] sm:$0xff]
      %v1375 = vld [vmem:[%s7 + $0xa8] sm:$0xff]
      %v1376 = vld [vmem:[%s7 + $0xb0] sm:$0xff]
      %v1377 = vld [vmem:[%s7 + $0xb8] sm:$0xff]
      %v1378 = vld [vmem:[%s7 + $0xc0] sm:$0xff]
      %v1379 = vld [vmem:[%s7 + $0xc8] sm:$0xff]
      %v1380 = vld [vmem:[%s7 + $0xd0] sm:$0xff]
      %v1381 = vld [vmem:[%s7 + $0xd8] sm:$0xff]
      %v1382 = vld [vmem:[%s7 + $0xe0] sm:$0xff]
      %v1383 = vld [vmem:[%s7 + $0xe8] sm:$0xff]
      %v1384 = vld [vmem:[%s7 + $0xf0] sm:$0xff]
      %v1385 = vld [vmem:[%s7 + $0xf8] sm:$0xff]
      %v1386 = vld [vmem:[%s8] sm:$0xff]
      %v1387 = vld [vmem:[%s8 + $0x8] sm:$0xff]
      %v1388 = vld [vmem:[%s8 + $0x10] sm:$0xff]
      %v1389 = vld [vmem:[%s8 + $0x18] sm:$0xff]
      %v1390 = vld [vmem:[%s8 + $0x20] sm:$0xff]
      %v1391 = vld [vmem:[%s8 + $0x28] sm:$0xff]
      %v1392 = vld [vmem:[%s8 + $0x30] sm:$0xff]
      %v1393 = vld [vmem:[%s8 + $0x38] sm:$0xff]
      %v1394 = vld [vmem:[%s8 + $0x40] sm:$0xff]
      %v1395 = vld [vmem:[%s8 + $0x48] sm:$0xff]
      %v1396 = vld [vmem:[%s8 + $0x50] sm:$0xff]
      %v1397 = vld [vmem:[%s8 + $0x58] sm:$0xff]
      %v1398 = vld [vmem:[%s8 + $0x60] sm:$0xff]
      %v1399 = vld [vmem:[%s8 + $0x68] sm:$0xff]
      %v1400 = vld [vmem:[%s8 + $0x70] sm:$0xff]
      %v1401 = vld [vmem:[%s8 + $0x78] sm:$0xff]
      %v1402 = vld [vmem:[%s8 + $0x80] sm:$0xff]
      %v1403 = vld [vmem:[%s8 + $0x88] sm:$0xff]
      %v1404 = vld [vmem:[%s8 + $0x90] sm:$0xff]
      %v1405 = vld [vmem:[%s8 + $0x98] sm:$0xff]
      %v1406 = vld [vmem:[%s8 + $0xa0] sm:$0xff]
      %v1407 = vld [vmem:[%s8 + $0xa8] sm:$0xff]
      %v1408 = vld [vmem:[%s8 + $0xb0] sm:$0xff]
      %v1409 = vld [vmem:[%s8 + $0xb8] sm:$0xff]
      %v1410 = vld [vmem:[%s8 + $0xc0] sm:$0xff]
      %v1411 = vld [vmem:[%s8 + $0xc8] sm:$0xff]
      %v1412 = vld [vmem:[%s8 + $0xd0] sm:$0xff]
      %v1413 = vld [vmem:[%s8 + $0xd8] sm:$0xff]
      %v1414 = vld [vmem:[%s8 + $0xe0] sm:$0xff]
      %v1415 = vld [vmem:[%s8 + $0xe8] sm:$0xff]
      %v1416 = vld [vmem:[%s8 + $0xf0] sm:$0xff]
      %v1417 = vld [vmem:[%s8 + $0xf8] sm:$0xff]
      %1419 = vset.pattern.permute.xlu0 0
      %1420 = vperm.xlu0 %1419, %v1386
      %v1421 = vpop.permute.xlu0 %1420
      %1424 = vset.pattern.permute.xlu0 0
      %1425 = vperm.xlu0 %1424, %v1387
      %v1426 = vpop.permute.xlu0 %1425
      %1429 = vset.pattern.permute.xlu0 0
      %1430 = vperm.xlu0 %1429, %v1388
      %v1431 = vpop.permute.xlu0 %1430
      %1434 = vset.pattern.permute.xlu0 0
      %1435 = vperm.xlu0 %1434, %v1389
      %v1436 = vpop.permute.xlu0 %1435
      %1439 = vset.pattern.permute.xlu0 0
      %1440 = vperm.xlu0 %1439, %v1390
      %v1441 = vpop.permute.xlu0 %1440
      %1444 = vset.pattern.permute.xlu0 0
      %1445 = vperm.xlu0 %1444, %v1391
      %v1446 = vpop.permute.xlu0 %1445
      %1449 = vset.pattern.permute.xlu0 0
      %1450 = vperm.xlu0 %1449, %v1392
      %v1451 = vpop.permute.xlu0 %1450
      %1454 = vset.pattern.permute.xlu0 0
      %1455 = vperm.xlu0 %1454, %v1393
      %v1456 = vpop.permute.xlu0 %1455
      %1459 = vset.pattern.permute.xlu0 0
      %1460 = vperm.xlu0 %1459, %v1394
      %v1461 = vpop.permute.xlu0 %1460
      %1464 = vset.pattern.permute.xlu0 0
      %1465 = vperm.xlu0 %1464, %v1395
      %v1466 = vpop.permute.xlu0 %1465
      %1469 = vset.pattern.permute.xlu0 0
      %1470 = vperm.xlu0 %1469, %v1396
      %v1471 = vpop.permute.xlu0 %1470
      %1474 = vset.pattern.permute.xlu0 0
      %1475 = vperm.xlu0 %1474, %v1397
      %v1476 = vpop.permute.xlu0 %1475
      %1479 = vset.pattern.permute.xlu0 0
      %1480 = vperm.xlu0 %1479, %v1398
      %v1481 = vpop.permute.xlu0 %1480
      %1484 = vset.pattern.permute.xlu0 0
      %1485 = vperm.xlu0 %1484, %v1399
      %v1486 = vpop.permute.xlu0 %1485
      %1489 = vset.pattern.permute.xlu0 0
      %1490 = vperm.xlu0 %1489, %v1400
      %v1491 = vpop.permute.xlu0 %1490
      %1494 = vset.pattern.permute.xlu0 0
      %1495 = vperm.xlu0 %1494, %v1401
      %v1496 = vpop.permute.xlu0 %1495
      %1499 = vset.pattern.permute.xlu0 0
      %1500 = vperm.xlu0 %1499, %v1402
      %v1501 = vpop.permute.xlu0 %1500
      %1504 = vset.pattern.permute.xlu0 0
      %1505 = vperm.xlu0 %1504, %v1403
      %v1506 = vpop.permute.xlu0 %1505
      %1509 = vset.pattern.permute.xlu0 0
      %1510 = vperm.xlu0 %1509, %v1404
      %v1511 = vpop.permute.xlu0 %1510
      %1514 = vset.pattern.permute.xlu0 0
      %1515 = vperm.xlu0 %1514, %v1405
      %v1516 = vpop.permute.xlu0 %1515
      %1519 = vset.pattern.permute.xlu0 0
      %1520 = vperm.xlu0 %1519, %v1406
      %v1521 = vpop.permute.xlu0 %1520
      %1524 = vset.pattern.permute.xlu0 0
      %1525 = vperm.xlu0 %1524, %v1407
      %v1526 = vpop.permute.xlu0 %1525
      %1529 = vset.pattern.permute.xlu0 0
      %1530 = vperm.xlu0 %1529, %v1408
      %v1531 = vpop.permute.xlu0 %1530
      %1534 = vset.pattern.permute.xlu0 0
      %1535 = vperm.xlu0 %1534, %v1409
      %v1536 = vpop.permute.xlu0 %1535
      %1539 = vset.pattern.permute.xlu0 0
      %1540 = vperm.xlu0 %1539, %v1410
      %v1541 = vpop.permute.xlu0 %1540
      %1544 = vset.pattern.permute.xlu0 0
      %1545 = vperm.xlu0 %1544, %v1411
      %v1546 = vpop.permute.xlu0 %1545
      %1549 = vset.pattern.permute.xlu0 0
      %1550 = vperm.xlu0 %1549, %v1412
      %v1551 = vpop.permute.xlu0 %1550
      %1554 = vset.pattern.permute.xlu0 0
      %1555 = vperm.xlu0 %1554, %v1413
      %v1556 = vpop.permute.xlu0 %1555
      %1559 = vset.pattern.permute.xlu0 0
      %1560 = vperm.xlu0 %1559, %v1414
      %v1561 = vpop.permute.xlu0 %1560
      %1564 = vset.pattern.permute.xlu0 0
      %1565 = vperm.xlu0 %1564, %v1415
      %v1566 = vpop.permute.xlu0 %1565
      %1569 = vset.pattern.permute.xlu0 0
      %1570 = vperm.xlu0 %1569, %v1416
      %v1571 = vpop.permute.xlu0 %1570
      %1574 = vset.pattern.permute.xlu0 0
      %1575 = vperm.xlu0 %1574, %v1417
      %v1576 = vpop.permute.xlu0 %1575
      %v1610 = vunpack.c.l.b16 %v1354
      %v1611 = vunpack.c.h.b16 %v1354
      %v1612 = vunpack.c.l.b16 %v1355
      %v1613 = vunpack.c.h.b16 %v1355
      %v1614 = vunpack.c.l.b16 %v1356
      %v1615 = vunpack.c.h.b16 %v1356
      %v1616 = vunpack.c.l.b16 %v1357
      %v1617 = vunpack.c.h.b16 %v1357
      %v1618 = vunpack.c.l.b16 %v1358
      %v1619 = vunpack.c.h.b16 %v1358
      %v1620 = vunpack.c.l.b16 %v1359
      %v1621 = vunpack.c.h.b16 %v1359
      %v1622 = vunpack.c.l.b16 %v1360
      %v1623 = vunpack.c.h.b16 %v1360
      %v1624 = vunpack.c.l.b16 %v1361
      %v1625 = vunpack.c.h.b16 %v1361
      %v1626 = vunpack.c.l.b16 %v1362
      %v1627 = vunpack.c.h.b16 %v1362
      %v1628 = vunpack.c.l.b16 %v1363
      %v1629 = vunpack.c.h.b16 %v1363
      %v1630 = vunpack.c.l.b16 %v1364
      %v1631 = vunpack.c.h.b16 %v1364
      %v1632 = vunpack.c.l.b16 %v1365
      %v1633 = vunpack.c.h.b16 %v1365
      %v1634 = vunpack.c.l.b16 %v1366
      %v1635 = vunpack.c.h.b16 %v1366
      %v1636 = vunpack.c.l.b16 %v1367
      %v1637 = vunpack.c.h.b16 %v1367
      %v1638 = vunpack.c.l.b16 %v1368
      %v1639 = vunpack.c.h.b16 %v1368
      %v1640 = vunpack.c.l.b16 %v1369
      %v1641 = vunpack.c.h.b16 %v1369
      %v1642 = vunpack.c.l.b16 %v1370
      %v1643 = vunpack.c.h.b16 %v1370
      %v1644 = vunpack.c.l.b16 %v1371
      %v1645 = vunpack.c.h.b16 %v1371
      %v1646 = vunpack.c.l.b16 %v1372
      %v1647 = vunpack.c.h.b16 %v1372
      %v1648 = vunpack.c.l.b16 %v1373
      %v1649 = vunpack.c.h.b16 %v1373
      %v1650 = vunpack.c.l.b16 %v1374
      %v1651 = vunpack.c.h.b16 %v1374
      %v1652 = vunpack.c.l.b16 %v1375
      %v1653 = vunpack.c.h.b16 %v1375
      %v1654 = vunpack.c.l.b16 %v1376
      %v1655 = vunpack.c.h.b16 %v1376
      %v1656 = vunpack.c.l.b16 %v1377
      %v1657 = vunpack.c.h.b16 %v1377
      %v1658 = vunpack.c.l.b16 %v1378
      %v1659 = vunpack.c.h.b16 %v1378
      %v1660 = vunpack.c.l.b16 %v1379
      %v1661 = vunpack.c.h.b16 %v1379
      %v1662 = vunpack.c.l.b16 %v1380
      %v1663 = vunpack.c.h.b16 %v1380
      %v1664 = vunpack.c.l.b16 %v1381
      %v1665 = vunpack.c.h.b16 %v1381
      %v1666 = vunpack.c.l.b16 %v1382
      %v1667 = vunpack.c.h.b16 %v1382
      %v1668 = vunpack.c.l.b16 %v1383
      %v1669 = vunpack.c.h.b16 %v1383
      %v1670 = vunpack.c.l.b16 %v1384
      %v1671 = vunpack.c.h.b16 %v1384
      %v1672 = vunpack.c.l.b16 %v1385
      %v1673 = vunpack.c.h.b16 %v1385
      %v1674 = vpack.c.b16 %v1612, %v1610
      %v1675 = vpack.c.b16 %v1613, %v1611
      %v1676 = vpack.c.b16 %v1616, %v1614
      %v1677 = vpack.c.b16 %v1617, %v1615
      %v1678 = vpack.c.b16 %v1620, %v1618
      %v1679 = vpack.c.b16 %v1621, %v1619
      %v1680 = vpack.c.b16 %v1624, %v1622
      %v1681 = vpack.c.b16 %v1625, %v1623
      %v1682 = vpack.c.b16 %v1628, %v1626
      %v1683 = vpack.c.b16 %v1629, %v1627
      %v1684 = vpack.c.b16 %v1632, %v1630
      %v1685 = vpack.c.b16 %v1633, %v1631
      %v1686 = vpack.c.b16 %v1636, %v1634
      %v1687 = vpack.c.b16 %v1637, %v1635
      %v1688 = vpack.c.b16 %v1640, %v1638
      %v1689 = vpack.c.b16 %v1641, %v1639
      %v1690 = vpack.c.b16 %v1644, %v1642
      %v1691 = vpack.c.b16 %v1645, %v1643
      %v1692 = vpack.c.b16 %v1648, %v1646
      %v1693 = vpack.c.b16 %v1649, %v1647
      %v1694 = vpack.c.b16 %v1652, %v1650
      %v1695 = vpack.c.b16 %v1653, %v1651
      %v1696 = vpack.c.b16 %v1656, %v1654
      %v1697 = vpack.c.b16 %v1657, %v1655
      %v1698 = vpack.c.b16 %v1660, %v1658
      %v1699 = vpack.c.b16 %v1661, %v1659
      %v1700 = vpack.c.b16 %v1664, %v1662
      %v1701 = vpack.c.b16 %v1665, %v1663
      %v1702 = vpack.c.b16 %v1668, %v1666
      %v1703 = vpack.c.b16 %v1669, %v1667
      %v1704 = vpack.c.b16 %v1672, %v1670
      %v1705 = vpack.c.b16 %v1673, %v1671
      %1738 = vmatprep.subr.bf16.mxu0 0
      %1739 = vmatpush1.bf16.msra.mxu0 %v1338
      %1740 = vmatprep.subr.bf16.mxu0 0
      %1741 = vmatpush1.bf16.msra.mxu0 %v1339
      %1742 = vmatprep.subr.bf16.mxu0 0
      %1743 = vmatpush1.bf16.msra.mxu0 %v1340
      %1744 = vmatprep.subr.bf16.mxu0 0
      %1745 = vmatpush1.bf16.msra.mxu0 %v1341
      %1746 = vmatprep.subr.bf16.mxu0 0
      %1747 = vmatpush1.bf16.msra.mxu0 %v1342
      %1748 = vmatprep.subr.bf16.mxu0 0
      %1749 = vmatpush1.bf16.msra.mxu0 %v1343
      %1750 = vmatprep.subr.bf16.mxu0 0
      %1751 = vmatpush1.bf16.msra.mxu0 %v1344
      %1752 = vmatprep.subr.bf16.mxu0 0
      %1753 = vmatpush1.bf16.msra.mxu0 %v1345
      %1754 = vmatprep.subr.bf16.mxu0 0
      %1755 = vmatpush1.bf16.msra.mxu0 %v1346
      %1756 = vmatprep.subr.bf16.mxu0 0
      %1757 = vmatpush1.bf16.msra.mxu0 %v1347
      %1758 = vmatprep.subr.bf16.mxu0 0
      %1759 = vmatpush1.bf16.msra.mxu0 %v1348
      %1760 = vmatprep.subr.bf16.mxu0 0
      %1761 = vmatpush1.bf16.msra.mxu0 %v1349
      %1762 = vmatprep.subr.bf16.mxu0 0
      %1763 = vmatpush1.bf16.msra.mxu0 %v1350
      %1764 = vmatprep.subr.bf16.mxu0 0
      %1765 = vmatpush1.bf16.msra.mxu0 %v1351
      %1766 = vmatprep.subr.bf16.mxu0 0
      %1767 = vmatpush1.bf16.msra.mxu0 %v1352
      %1768 = vmatprep.subr.bf16.mxu0 0
      %1769 = vmatpush1.bf16.msra.mxu0 %v1353
      %1770 = vmatprep.mubr.bf16.mxu0 %v1675
      %1771 = vmatmul.mubr.bf16.gmra.mrb[0].mxu0 %v1674
      %v1772 = vpop.f32.mrb[0].mxu0
      %v1773 = vadd.f32 %v1421, %v1772
      %v1774 = vpop.f32.mrb[0].mxu0
      %v1775 = vpop.f32.mrb[0].mxu0
      %v1776 = vadd.f32 %v1426, %v1775
      %v1777 = vpop.f32.mrb[0].mxu0
      %1778 = vmatprep.mubr.bf16.mxu0 %v1677
      %1779 = vmatmul.mubr.bf16.gmra.mrb[0].mxu0 %v1676
      %v1780 = vpop.f32.mrb[0].mxu0
      %v1781 = vadd.f32 %v1431, %v1780
      %v1782 = vpop.f32.mrb[0].mxu0
      %v1783 = vpop.f32.mrb[0].mxu0
      %v1784 = vadd.f32 %v1436, %v1783
      %v1785 = vpop.f32.mrb[0].mxu0
      %1786 = vmatprep.mubr.bf16.mxu0 %v1679
      %1787 = vmatmul.mubr.bf16.gmra.mrb[0].mxu0 %v1678
      %v1788 = vpop.f32.mrb[0].mxu0
      %v1789 = vadd.f32 %v1441, %v1788
      %v1790 = vpop.f32.mrb[0].mxu0
      %v1791 = vpop.f32.mrb[0].mxu0
      %v1792 = vadd.f32 %v1446, %v1791
      %v1793 = vpop.f32.mrb[0].mxu0
      %1794 = vmatprep.mubr.bf16.mxu0 %v1681
      %1795 = vmatmul.mubr.bf16.gmra.mrb[0].mxu0 %v1680
      %v1796 = vpop.f32.mrb[0].mxu0
      %v1797 = vadd.f32 %v1451, %v1796
      %v1798 = vpop.f32.mrb[0].mxu0
      %v1799 = vpop.f32.mrb[0].mxu0
      %v1800 = vadd.f32 %v1456, %v1799
      %v1801 = vpop.f32.mrb[0].mxu0
      %1802 = vmatprep.mubr.bf16.mxu0 %v1683
      %1803 = vmatmul.mubr.bf16.gmra.mrb[0].mxu0 %v1682
      %v1804 = vpop.f32.mrb[0].mxu0
      %v1805 = vadd.f32 %v1461, %v1804
      %v1806 = vpop.f32.mrb[0].mxu0
      %v1807 = vpop.f32.mrb[0].mxu0
      %v1808 = vadd.f32 %v1466, %v1807
      %v1809 = vpop.f32.mrb[0].mxu0
      %1810 = vmatprep.mubr.bf16.mxu0 %v1685
      %1811 = vmatmul.mubr.bf16.gmra.mrb[0].mxu0 %v1684
      %v1812 = vpop.f32.mrb[0].mxu0
      %v1813 = vadd.f32 %v1471, %v1812
      %v1814 = vpop.f32.mrb[0].mxu0
      %v1815 = vpop.f32.mrb[0].mxu0
      %v1816 = vadd.f32 %v1476, %v1815
      %v1817 = vpop.f32.mrb[0].mxu0
      %1818 = vmatprep.mubr.bf16.mxu0 %v1687
      %1819 = vmatmul.mubr.bf16.gmra.mrb[0].mxu0 %v1686
      %v1820 = vpop.f32.mrb[0].mxu0
      %v1821 = vadd.f32 %v1481, %v1820
      %v1822 = vpop.f32.mrb[0].mxu0
      %v1823 = vpop.f32.mrb[0].mxu0
      %v1824 = vadd.f32 %v1486, %v1823
      %v1825 = vpop.f32.mrb[0].mxu0
      %1826 = vmatprep.mubr.bf16.mxu0 %v1689
      %1827 = vmatmul.mubr.bf16.gmra.mrb[0].mxu0 %v1688
      %v1828 = vpop.f32.mrb[0].mxu0
      %v1829 = vadd.f32 %v1491, %v1828
      %v1830 = vpop.f32.mrb[0].mxu0
      %v1831 = vpop.f32.mrb[0].mxu0
      %v1832 = vadd.f32 %v1496, %v1831
      %v1833 = vpop.f32.mrb[0].mxu0
      %1834 = vmatprep.mubr.bf16.mxu0 %v1691
      %1835 = vmatmul.mubr.bf16.gmra.mrb[0].mxu0 %v1690
      %v1836 = vpop.f32.mrb[0].mxu0
      %v1837 = vadd.f32 %v1501, %v1836
      %v1838 = vpop.f32.mrb[0].mxu0
      %v1839 = vpop.f32.mrb[0].mxu0
      %v1840 = vadd.f32 %v1506, %v1839
      %v1841 = vpop.f32.mrb[0].mxu0
      %1842 = vmatprep.mubr.bf16.mxu0 %v1693
      %1843 = vmatmul.mubr.bf16.gmra.mrb[0].mxu0 %v1692
      %v1844 = vpop.f32.mrb[0].mxu0
      %v1845 = vadd.f32 %v1511, %v1844
      %v1846 = vpop.f32.mrb[0].mxu0
      %v1847 = vpop.f32.mrb[0].mxu0
      %v1848 = vadd.f32 %v1516, %v1847
      %v1849 = vpop.f32.mrb[0].mxu0
      %1850 = vmatprep.mubr.bf16.mxu0 %v1695
      %1851 = vmatmul.mubr.bf16.gmra.mrb[0].mxu0 %v1694
      %v1852 = vpop.f32.mrb[0].mxu0
      %v1853 = vadd.f32 %v1521, %v1852
      %v1854 = vpop.f32.mrb[0].mxu0
      %v1855 = vpop.f32.mrb[0].mxu0
      %v1856 = vadd.f32 %v1526, %v1855
      %v1857 = vpop.f32.mrb[0].mxu0
      %1858 = vmatprep.mubr.bf16.mxu0 %v1697
      %1859 = vmatmul.mubr.bf16.gmra.mrb[0].mxu0 %v1696
      %v1860 = vpop.f32.mrb[0].mxu0
      %v1861 = vadd.f32 %v1531, %v1860
      %v1862 = vpop.f32.mrb[0].mxu0
      %v1863 = vpop.f32.mrb[0].mxu0
      %v1864 = vadd.f32 %v1536, %v1863
      %v1865 = vpop.f32.mrb[0].mxu0
      %1866 = vmatprep.mubr.bf16.mxu0 %v1699
      %1867 = vmatmul.mubr.bf16.gmra.mrb[0].mxu0 %v1698
      %v1868 = vpop.f32.mrb[0].mxu0
      %v1869 = vadd.f32 %v1541, %v1868
      %v1870 = vpop.f32.mrb[0].mxu0
      %v1871 = vpop.f32.mrb[0].mxu0
      %v1872 = vadd.f32 %v1546, %v1871
      %v1873 = vpop.f32.mrb[0].mxu0
      %1874 = vmatprep.mubr.bf16.mxu0 %v1701
      %1875 = vmatmul.mubr.bf16.gmra.mrb[0].mxu0 %v1700
      %v1876 = vpop.f32.mrb[0].mxu0
      %v1877 = vadd.f32 %v1551, %v1876
      %v1878 = vpop.f32.mrb[0].mxu0
      %v1879 = vpop.f32.mrb[0].mxu0
      %v1880 = vadd.f32 %v1556, %v1879
      %v1881 = vpop.f32.mrb[0].mxu0
      %1882 = vmatprep.mubr.bf16.mxu0 %v1703
      %1883 = vmatmul.mubr.bf16.gmra.mrb[0].mxu0 %v1702
      %v1884 = vpop.f32.mrb[0].mxu0
      %v1885 = vadd.f32 %v1561, %v1884
      %v1886 = vpop.f32.mrb[0].mxu0
      %v1887 = vpop.f32.mrb[0].mxu0
      %v1888 = vadd.f32 %v1566, %v1887
      %v1889 = vpop.f32.mrb[0].mxu0
      %1890 = vmatprep.mubr.bf16.mxu0 %v1705
      %1891 = vmatmul.mubr.bf16.gmra.mrb[0].mxu0 %v1704
      %v1892 = vpop.f32.mrb[0].mxu0
      %v1893 = vadd.f32 %v1571, %v1892
      %v1894 = vpop.f32.mrb[0].mxu0
      %v1895 = vpop.f32.mrb[0].mxu0
      %v1896 = vadd.f32 %v1576, %v1895
      %v1897 = vpop.f32.mrb[0].mxu0
      %1898 = vdwg.mxu0
      %v1899 = vpack.c.bf16 %v1776, %v1773
      %v1900 = vpack.c.bf16 %v1784, %v1781
      %v1901 = vpack.c.bf16 %v1792, %v1789
      %v1902 = vpack.c.bf16 %v1800, %v1797
      %v1903 = vpack.c.bf16 %v1808, %v1805
      %v1904 = vpack.c.bf16 %v1816, %v1813
      %v1905 = vpack.c.bf16 %v1824, %v1821
      %v1906 = vpack.c.bf16 %v1832, %v1829
      %v1907 = vpack.c.bf16 %v1840, %v1837
      %v1908 = vpack.c.bf16 %v1848, %v1845
      %v1909 = vpack.c.bf16 %v1856, %v1853
      %v1910 = vpack.c.bf16 %v1864, %v1861
      %v1911 = vpack.c.bf16 %v1872, %v1869
      %v1912 = vpack.c.bf16 %v1880, %v1877
      %v1913 = vpack.c.bf16 %v1888, %v1885
      %v1914 = vpack.c.bf16 %v1896, %v1893
      %v1915 = vmax.bf16 %v1899, 0
      %v1916 = vmax.bf16 %v1900, 0
      %v1917 = vmax.bf16 %v1901, 0
      %v1918 = vmax.bf16 %v1902, 0
      %v1919 = vmax.bf16 %v1903, 0
      %v1920 = vmax.bf16 %v1904, 0
      %v1921 = vmax.bf16 %v1905, 0
      %v1922 = vmax.bf16 %v1906, 0
      %v1923 = vmax.bf16 %v1907, 0
      %v1924 = vmax.bf16 %v1908, 0
      %v1925 = vmax.bf16 %v1909, 0
      %v1926 = vmax.bf16 %v1910, 0
      %v1927 = vmax.bf16 %v1911, 0
      %v1928 = vmax.bf16 %v1912, 0
      %v1929 = vmax.bf16 %v1913, 0
      %v1930 = vmax.bf16 %v1914, 0
      %v1931 = vld [vmem:[%s9] sm:$0xff]
      %v1933 = vunpack.c.l.b16 %v1931
      %v1934 = vunpack.c.h.b16 %v1931
      %v1935 = vpack.c.b16 %v1933, %v1933
      %v1936 = vpack.c.b16 %v1934, %v1934
      %1939 = vmatprep.subr.bf16.mxu0 0
      %1940 = vmatpush1.bf16.msra.mxu0 %v1915
      %1941 = vmatprep.subr.bf16.mxu0 0
      %1942 = vmatpush1.bf16.msra.mxu0 %v1916
      %1943 = vmatprep.subr.bf16.mxu0 0
      %1944 = vmatpush1.bf16.msra.mxu0 %v1917
      %1945 = vmatprep.subr.bf16.mxu0 0
      %1946 = vmatpush1.bf16.msra.mxu0 %v1918
      %1947 = vmatprep.subr.bf16.mxu0 0
      %1948 = vmatpush1.bf16.msra.mxu0 %v1919
      %1949 = vmatprep.subr.bf16.mxu0 0
      %1950 = vmatpush1.bf16.msra.mxu0 %v1920
      %1951 = vmatprep.subr.bf16.mxu0 0
      %1952 = vmatpush1.bf16.msra.mxu0 %v1921
      %1953 = vmatprep.subr.bf16.mxu0 0
      %1954 = vmatpush1.bf16.msra.mxu0 %v1922
      %1955 = vmatprep.subr.bf16.mxu0 0
      %1956 = vmatpush1.bf16.msra.mxu0 %v1923
      %1957 = vmatprep.subr.bf16.mxu0 0
      %1958 = vmatpush1.bf16.msra.mxu0 %v1924
      %1959 = vmatprep.subr.bf16.mxu0 0
      %1960 = vmatpush1.bf16.msra.mxu0 %v1925
      %1961 = vmatprep.subr.bf16.mxu0 0
      %1962 = vmatpush1.bf16.msra.mxu0 %v1926
      %1963 = vmatprep.subr.bf16.mxu0 0
      %1964 = vmatpush1.bf16.msra.mxu0 %v1927
      %1965 = vmatprep.subr.bf16.mxu0 0
      %1966 = vmatpush1.bf16.msra.mxu0 %v1928
      %1967 = vmatprep.subr.bf16.mxu0 0
      %1968 = vmatpush1.bf16.msra.mxu0 %v1929
      %1969 = vmatprep.subr.bf16.mxu0 0
      %1970 = vmatpush1.bf16.msra.mxu0 %v1930
      %1971 = vmatprep.mubr.bf16.mxu0 %v1936
      %1972 = vmatmul.mubr.bf16.gmra.mrb[0].mxu0 %v1935
      %v1973 = vpop.f32.mrb[0].mxu0
      %v1974 = vadd.f32 0.0, %v1973
      %v1975 = vpop.f32.mrb[0].mxu0
      %v1976 = vpop.f32.mrb[0].mxu0
      %v1977 = vpop.f32.mrb[0].mxu0
      %1978 = vdwg.mxu0
      %v1979 = vld [vmem:[#allocation2] sm:$0x1]
      %1981 = vset.pattern.permute.xlu0 0
      %1982 = vperm.xlu0 %1981, %v1979
      %v1983 = vpop.permute.xlu0 %1982
      %v1985 = vlaneseq
      %v1986 = vshrl.u32 %v1985, 7
      %v1987 = vsub.s32 0, %v1986
      %v1988 = vrot.slane %v1983, %v1987
      %v1989 = vadd.f32 %v1974, %v1988
      %v1990 = vxor.u32 %v1989, 2147483648
      %v1991 = vmul.f32 %v1990, 1.442695
      %v1992 = vpow.pop %v1991
      %v1993 = vadd.f32 %v1992, 1.0
      %v1994 = vrcp.pop %v1993
      %v1995 = vmul.f32 1.0, %v1994
      %1996 = vst [vmem:[%s381] sm:$0x1] %v1995
      %p1997 = scmp.lt.s32.totalorder %s24, 1
      %s1998 = scalar_select %p1997, %s24, 1
      %s1999 = scalar_lea.vmem %s11, %s1998
      // Predicated region
      $region65: #{fcnn_forward.1} parent=63 // pred_check
        %p2000 = pneg %p278
      $region66: #{fcnn_forward.1} parent=63 // pred_check_branch
        %2002 = sbr.rel (%p2000) target = $region68
      $region67: #{fcnn_forward.1} parent=63 // pred_region
        _
      $region68: #{fcnn_forward.1} parent=63 // pred_fallthru
        _
    $region64: #{fcnn_forward.1} parent=5 // pred_fallthru
      _
    %p2003 = scmp.le.s32.totalorder 2, %s19
    // Predicated region
    $region69: #{fcnn_forward.1} parent=5 // pred_check
      %p2004 = pneg %p2003
    $region70: #{fcnn_forward.1} parent=5 // pred_check_branch
      %2006 = sbr.rel (%p2004) target = $region72
    $region71: #{fcnn_forward.1} parent=5 // pred_region
      %s2007 = ssub.s32 %s19, 2
      // Predicated region
      $region73: #{fcnn_forward.1} parent=71 // pred_check
        %p2008 = pneg %p284
      $region74: #{fcnn_forward.1} parent=71 // pred_check_branch
        %2010 = sbr.rel (%p2008) target = $region76
      $region75: #{fcnn_forward.1} parent=71 // pred_region
        %p2011 = scmp.lt.s32.totalorder %s25, 1
        %s2012 = scalar_select %p2011, %s25, 1
        %s2013 = scalar_lea.vmem %s11, %s2012
      $region76: #{fcnn_forward.1} parent=71 // pred_fallthru
        _
    $region72: #{fcnn_forward.1} parent=5 // pred_fallthru
      _
  $region6: #{fcnn_forward.1} parent=0 // loop_footer
    %s23 = sadd.s32 1, %s19
  $region7: #{fcnn_forward.1} parent=0 // loop_footer_branch
    %18 = sbr.rel target = $region3
  $region8: #{fcnn_forward.1} parent=0 // loop_exit
    _

</llo_original>
